<compile_context>
chip_gen: v7x
topology: tpu7x:2x2x1
jax: 0.10.0
libtpu: 0.0.40
codegen_flags: <defaults>
</compile_context>

<pallas_src>
import jax
import jax.numpy as jnp
from jax.experimental import pallas as pl
from jax.experimental.pallas import tpu as pltpu

C_IN = 112
C_OUT = 672
EPS = 1e-3

# bf16 x bf16 -> f32 on the MXU (native fast path on v5e/v6e/v7x, halves matmul
# operand bytes).  BN statistics and all accumulation stay float32.
MXU_DTYPE = jnp.bfloat16

# Scoped VMEM budget: enough for tile_p = 2048 double-buffered tiles while
# staying well under v7x's 64 MiB physical VMEM per TensorCore.
_VMEM_LIMIT = 48 * 1024 * 1024


def _round_up(x, m):
    return ((x + m - 1) // m) * m


def _mask_tail(x, col0, p_real):
    """Zero columns >= p_real (garbage columns of a partial boundary block)."""
    tile = x.shape[-1]
    col = jax.lax.broadcasted_iota(jnp.int32, (1, tile), 1) + col0
    return jnp.where(col < p_real, x, 0.0)


# ----------------------------------------------------------------------------
# Path 1: whole problem in VMEM -> single fused launch, split over C_OUT so the
# two v7x TensorCores each take half of the output channels (BN1 stats are
# recomputed redundantly per core, which is cheap).
# ----------------------------------------------------------------------------
def _make_fused_kernel(inv_p):
    def kernel(xa_ref, xb_ref, w_ref, g1_ref, b1_ref, g2_ref, b2_ref, o_ref):
        xa = xa_ref[...]                                         # (C_IN, P) f32
        # BN1: full-batch stats, folded to x*scale + shift.
        mean1 = jnp.sum(xa, axis=1, keepdims=True) * inv_p
        var1 = jnp.maximum(
            jnp.sum(xa * xa, axis=1, keepdims=True) * inv_p - mean1 * mean1, 0.0)
        scale1 = g1_ref[...] * jax.lax.rsqrt(var1 + EPS)
        shift1 = b1_ref[...] - mean1 * scale1
        x134 = xa * scale1 + shift1 + xb_ref[...]
        # 1x1 conv == (C_OUT/2, C_IN) @ (C_IN, P) on the MXU (bf16 in, f32 acc).
        y = jnp.dot(w_ref[...], x134.astype(w_ref.dtype),
                    preferred_element_type=jnp.float32)
        # BN2 over this core's channel slice (exact: stats are per-channel).
        mean2 = jnp.sum(y, axis=1, keepdims=True) * inv_p
        var2 = jnp.maximum(
            jnp.sum(y * y, axis=1, keepdims=True) * inv_p - mean2 * mean2, 0.0)
        scale2 = g2_ref[...] * jax.lax.rsqrt(var2 + EPS)
        shift2 = b2_ref[...] - mean2 * scale2
        o_ref[...] = y * scale2 + shift2
    return kernel


def _run_fused(x132_f, x119_f, w_mat, g1c, b1c, g2c, b2c):
    c_in, p = x132_f.shape
    c_out = w_mat.shape[0]
    nc = 2 if c_out % 16 == 0 else 1          # split output channels over TCs
    co = c_out // nc
    cost = pl.CostEstimate(
        flops=2 * p * c_in * c_out,
        transcendentals=nc * c_in + c_out,
        bytes_accessed=4 * (2 * p * c_in + p * c_out)
        + w_mat.dtype.itemsize * c_in * c_out,
    )
    return pl.pallas_call(
        _make_fused_kernel(1.0 / p),
        out_shape=jax.ShapeDtypeStruct((c_out, p), jnp.float32),
        grid=(nc,),
        in_specs=[
            pl.BlockSpec((c_in, p), lambda i: (0, 0)),
            pl.BlockSpec((c_in, p), lambda i: (0, 0)),
            pl.BlockSpec((co, c_in), lambda i: (i, 0)),
            pl.BlockSpec((c_in, 1), lambda i: (0, 0)),
            pl.BlockSpec((c_in, 1), lambda i: (0, 0)),
            pl.BlockSpec((co, 1), lambda i: (i, 0)),
            pl.BlockSpec((co, 1), lambda i: (i, 0)),
        ],
        out_specs=pl.BlockSpec((co, p), lambda i: (i, 0)),
        compiler_params=pltpu.CompilerParams(
            dimension_semantics=("parallel",),
            vmem_limit_bytes=_VMEM_LIMIT),
        cost_estimate=cost,
    )(x132_f, x119_f, w_mat, g1c, b1c, g2c, b2c)


# ----------------------------------------------------------------------------
# Path 2: tiled over P, 3 passes, exact full-batch BN statistics.
#   A: BN1 sum/sumsq of x132                    -> scale1/shift1
#   B: x134 + conv (stats only, no HBM output)  -> per-core BN2 partial sums
#   C: recompute x134 + conv, apply BN2         -> final output
# ----------------------------------------------------------------------------
def _run_tiled(x132_f, x119_f, w_mat, g1c, b1c, g2c, b2c, tile_p):
    c_in, p = x132_f.shape
    c_out = w_mat.shape[0]
    nt = (p + tile_p - 1) // tile_p
    ragged = (p % tile_p) != 0
    inv_p = 1.0 / p

    # ---- Pass A: BN1 per-channel scale/shift from full-batch stats of x132.
    def bn1_stats_kernel(x_ref, g_ref, b_ref, s_ref, t_ref):
        i = pl.program_id(0)

        @pl.when(i == 0)
        def _():
            s_ref[...] = jnp.zeros_like(s_ref)
            t_ref[...] = jnp.zeros_like(t_ref)

        x = x_ref[...]
        if ragged:
            x = _mask_tail(x, i * tile_p, p)
        s_ref[...] += jnp.sum(x, axis=1, keepdims=True)
        t_ref[...] += jnp.sum(x * x, axis=1, keepdims=True)

        @pl.when(i == pl.num_programs(0) - 1)
        def _():
            mean = s_ref[...] * inv_p
            var = jnp.maximum(t_ref[...] * inv_p - mean * mean, 0.0)
            scale = g_ref[...] * jax.lax.rsqrt(var + EPS)
            s_ref[...] = scale
            t_ref[...] = b_ref[...] - mean * scale

    scale1, shift1 = pl.pallas_call(
        bn1_stats_kernel,
        out_shape=(jax.ShapeDtypeStruct((c_in, 1), jnp.float32),
                   jax.ShapeDtypeStruct((c_in, 1), jnp.float32)),
        grid=(nt,),
        in_specs=[
            pl.BlockSpec((c_in, tile_p), lambda i: (0, i)),
            pl.BlockSpec((c_in, 1), lambda i: (0, 0)),
            pl.BlockSpec((c_in, 1), lambda i: (0, 0)),
        ],
        out_specs=(pl.BlockSpec((c_in, 1), lambda i: (0, 0)),
                   pl.BlockSpec((c_in, 1), lambda i: (0, 0))),
        compiler_params=pltpu.CompilerParams(
            dimension_semantics=("arbitrary",),
            vmem_limit_bytes=_VMEM_LIMIT),
    )(x132_f, g1c, b1c)

    # ---- Pass B: BN1 apply + residual + 1x1 conv, accumulating BN2 partial
    #      sum / sumsq only (the (C_OUT, P) activation never hits HBM).
    #      Split over (up to) 2 TensorCores along the P-tile axis.
    nc = 2 if (nt >= 2 and nt % 2 == 0) else 1
    nt_pc = nt // nc

    def conv_stats_kernel(s1_ref, t1_ref, xa_ref, xb_ref, w_ref,
                          s2_ref, t2_ref):
        c = pl.program_id(0)
        i = pl.program_id(1)

        @pl.when(i == 0)
        def _():
            s2_ref[...] = jnp.zeros_like(s2_ref)
            t2_ref[...] = jnp.zeros_like(t2_ref)

        x134 = xa_ref[...] * s1_ref[...] + t1_ref[...] + xb_ref[...]
        if ragged:
            x134 = _mask_tail(x134, (c * nt_pc + i) * tile_p, p)

        y = jnp.dot(w_ref[...], x134.astype(w_ref.dtype),
                    preferred_element_type=jnp.float32)      # (C_OUT, tile_p)
        # sum_j y[:, j] == W @ colsum(x134): tiny matvec instead of a full
        # (C_OUT, tile_p) cross-lane reduce (XLU relief).
        cs = jnp.sum(x134, axis=1, keepdims=True)            # (C_IN, 1) f32
        s2_ref[...] += jnp.dot(w_ref[...].astype(jnp.float32), cs,
                               preferred_element_type=jnp.float32)
        t2_ref[...] += jnp.sum(y * y, axis=1, keepdims=True)

    cost_b = pl.CostEstimate(
        flops=2 * p * c_in * c_out,
        transcendentals=0,
        bytes_accessed=4 * 2 * p * c_in + w_mat.dtype.itemsize * c_in * c_out,
    )
    sum2, sumsq2 = pl.pallas_call(
        conv_stats_kernel,
        out_shape=(jax.ShapeDtypeStruct((nc * c_out, 1), jnp.float32),
                   jax.ShapeDtypeStruct((nc * c_out, 1), jnp.float32)),
        grid=(nc, nt_pc),
        in_specs=[
            pl.BlockSpec((c_in, 1), lambda c, i: (0, 0)),
            pl.BlockSpec((c_in, 1), lambda c, i: (0, 0)),
            pl.BlockSpec((c_in, tile_p), lambda c, i: (0, c * nt_pc + i)),
            pl.BlockSpec((c_in, tile_p), lambda c, i: (0, c * nt_pc + i)),
            pl.BlockSpec((c_out, c_in), lambda c, i: (0, 0)),
        ],
        out_specs=(pl.BlockSpec((c_out, 1), lambda c, i: (c, 0)),
                   pl.BlockSpec((c_out, 1), lambda c, i: (c, 0))),
        compiler_params=pltpu.CompilerParams(
            dimension_semantics=("parallel", "arbitrary"),
            vmem_limit_bytes=_VMEM_LIMIT),
        cost_estimate=cost_b,
    )(scale1, shift1, x132_f, x119_f, w_mat)

    # ---- Pass C: recompute x134, conv again, apply BN2 -> final output.
    #      Purely "parallel" over P tiles (megacore shards it on v7x); the
    #      BN2 partial-sum reduction + rsqrt is a tiny per-tile prologue.
    def bn2_apply_kernel(s1_ref, t1_ref, s2_ref, t2_ref, g2_ref, b2_ref,
                         xa_ref, xb_ref, w_ref, o_ref):
        sp = s2_ref[...]
        tp = t2_ref[...]
        s_tot = sp[0:c_out]
        t_tot = tp[0:c_out]
        for j in range(1, nc):
            s_tot = s_tot + sp[j * c_out:(j + 1) * c_out]
            t_tot = t_tot + tp[j * c_out:(j + 1) * c_out]
        mean2 = s_tot * inv_p
        var2 = jnp.maximum(t_tot * inv_p - mean2 * mean2, 0.0)
        scale2 = g2_ref[...] * jax.lax.rsqrt(var2 + EPS)
        shift2 = b2_ref[...] - mean2 * scale2

        x134 = xa_ref[...] * s1_ref[...] + t1_ref[...] + xb_ref[...]
        y = jnp.dot(w_ref[...], x134.astype(w_ref.dtype),
                    preferred_element_type=jnp.float32)
        o_ref[...] = y * scale2 + shift2
        # Columns beyond P in the boundary block are garbage but column-local;
        # Pallas drops the out-of-bounds part of the partial store.

    cost_c = pl.CostEstimate(
        flops=2 * p * c_in * c_out,
        transcendentals=c_out * nt,
        bytes_accessed=4 * (2 * p * c_in + p * c_out)
        + w_mat.dtype.itemsize * c_in * c_out,
    )
    return pl.pallas_call(
        bn2_apply_kernel,
        out_shape=jax.ShapeDtypeStruct((c_out, p), jnp.float32),
        grid=(nt,),
        in_specs=[
            pl.BlockSpec((c_in, 1), lambda i: (0, 0)),
            pl.BlockSpec((c_in, 1), lambda i: (0, 0)),
            pl.BlockSpec((nc * c_out, 1), lambda i: (0, 0)),
            pl.BlockSpec((nc * c_out, 1), lambda i: (0, 0)),
            pl.BlockSpec((c_out, 1), lambda i: (0, 0)),
            pl.BlockSpec((c_out, 1), lambda i: (0, 0)),
            pl.BlockSpec((c_in, tile_p), lambda i: (0, i)),
            pl.BlockSpec((c_in, tile_p), lambda i: (0, i)),
            pl.BlockSpec((c_out, c_in), lambda i: (0, 0)),
        ],
        out_specs=pl.BlockSpec((c_out, tile_p), lambda i: (0, i)),
        compiler_params=pltpu.CompilerParams(
            dimension_semantics=("parallel",),
            vmem_limit_bytes=_VMEM_LIMIT),
        cost_estimate=cost_c,
    )(scale1, shift1, sum2, sumsq2, g2c, b2c, x132_f, x119_f, w_mat)


# ----------------------------------------------------------------------------
# Public wrapper (matches M.forward semantics).
# ----------------------------------------------------------------------------
def fused_bn_add_conv_bn(x132, x119, w_conv, g1, b1, g2, b2, tile_p=2048):
    """x132, x119: (N, 112, H, W) f32; w_conv: (672, 112, 1, 1) f32.
    Returns (N, 672, H, W) f32 (training-mode BN on both BatchNorms)."""
    n, c, h, w = x132.shape
    assert c == C_IN and w_conv.shape == (C_OUT, C_IN, 1, 1)
    p = n * h * w

    # NCHW -> channel-major (C, P).  Free reshape for n == 1 (the spec shape).
    if n == 1:
        x132_f = x132.reshape(C_IN, p)
        x119_f = x119.reshape(C_IN, p)
    else:
        # TODO(synk): fold the N>1 transpose into the kernel layout if batched
        # use matters; moveaxis is a hidden HBM round trip.
        x132_f = jnp.moveaxis(x132, 1, 0).reshape(C_IN, p)
        x119_f = jnp.moveaxis(x119, 1, 0).reshape(C_IN, p)

    w_mat = w_conv.reshape(C_OUT, C_IN).astype(MXU_DTYPE)   # single host cast
    g1c = g1.reshape(C_IN, 1).astype(jnp.float32)
    b1c = b1.reshape(C_IN, 1).astype(jnp.float32)
    g2c = g2.reshape(C_OUT, 1).astype(jnp.float32)
    b2c = b2.reshape(C_OUT, 1).astype(jnp.float32)

    tile_p = max(128, (int(tile_p) // 128) * 128)   # lane-aligned tile width

    if _round_up(p, 128) <= tile_p:
        # Single fused launch, zero intermediate HBM traffic.
        out_flat = _run_fused(x132_f, x119_f, w_mat, g1c, b1c, g2c, b2c)
    else:
        # Exact full-batch BN via 3 tiled passes; ragged tail handled in-kernel
        # (no host-side pad / slice).
        out_flat = _run_tiled(x132_f, x119_f, w_mat, g1c, b1c, g2c, b2c, tile_p)

    if n == 1:
        return out_flat.reshape(1, C_OUT, h, w)
    return jnp.moveaxis(out_flat.reshape(C_OUT, n, h, w), 0, 1)


# ----------------------------------------------------------------------------
# Pure-JAX reference (for in-script correctness check).
# ----------------------------------------------------------------------------
def _reference(x132, x119, w_conv, g1, b1, g2, b2):
    def bn(x, g, b):
        mean = jnp.mean(x, axis=(0, 2, 3), keepdims=True)
        var = jnp.mean(jnp.square(x - mean), axis=(0, 2, 3), keepdims=True)
        return ((x - mean) * jax.lax.rsqrt(var + EPS) * g.reshape(1, -1, 1, 1)
                + b.reshape(1, -1, 1, 1))

    x133 = bn(x132, g1, b1)
    x134 = x133 + x119
    x135 = jnp.einsum("nchw,oc->nohw", x134, w_conv.reshape(C_OUT, C_IN),
                      precision=jax.lax.Precision.HIGHEST)
    return bn(x135, g2, b2)


if __name__ == "__main__":
    key = jax.random.PRNGKey(0)
    ks = jax.random.split(key, 7)

    N, H, W = 1, 14, 14                     # shape from the module spec
    x132 = jax.random.normal(ks[0], (N, C_IN, H, W), dtype=jnp.float32)
    x119 = jax.random.normal(ks[1], (N, C_IN, H, W), dtype=jnp.float32)
    w_conv = 0.05 * jax.random.normal(ks[2], (C_OUT, C_IN, 1, 1), dtype=jnp.float32)
    gamma1 = 1.0 + 0.1 * jax.random.normal(ks[3], (C_IN,), dtype=jnp.float32)
    beta1 = 0.1 * jax.random.normal(ks[4], (C_IN,), dtype=jnp.float32)
    gamma2 = 1.0 + 0.1 * jax.random.normal(ks[5], (C_OUT,), dtype=jnp.float32)
    beta2 = 0.1 * jax.random.normal(ks[6], (C_OUT,), dtype=jnp.float32)

    # f32 MXU: tight tolerance.  bf16 MXU operands (f32 accumulate): rounding
    # of conv operands only, BN statistics stay f32 -> looser but small bound.
    tol = 1e-2 if jnp.dtype(MXU_DTYPE) == jnp.dtype(jnp.float32) else 4e-2

    fwd = jax.jit(fused_bn_add_conv_bn, static_argnames=("tile_p",))

    # Path 1: single fused kernel (spec-size problem, P = 196).
    ref = jax.block_until_ready(
        _reference(x132, x119, w_conv, gamma1, beta1, gamma2, beta2))
    out_fused = jax.block_until_ready(
        fwd(x132, x119, w_conv, gamma1, beta1, gamma2, beta2))
    assert out_fused.shape == (N, C_OUT, H, W), out_fused.shape
    err = float(jnp.max(jnp.abs(out_fused - ref)))
    assert err < tol, f"fused path mismatch: {err}"

    # Path 2: force the tiled 3-pass scheme on the same data
    # (tile_p=128 -> 2 P-tiles, ragged 68-column tail, 2-way split of pass B).
    out_tiled = jax.block_until_ready(
        fwd(x132, x119, w_conv, gamma1, beta1, gamma2, beta2, tile_p=128))
    assert out_tiled.shape == (N, C_OUT, H, W), out_tiled.shape
    err = float(jnp.max(jnp.abs(out_tiled - ref)))
    assert err < tol, f"tiled path mismatch: {err}"

    # Path 2 at a larger non-tile-aligned P (H=W=40 -> P=1600, tile_p=512:
    # 4 tiles, 64-column ragged tail, 2 tiles per core in pass B).
    H2 = W2 = 40
    x132b = jax.random.normal(ks[0], (1, C_IN, H2, W2), dtype=jnp.float32)
    x119b = jax.random.normal(ks[1], (1, C_IN, H2, W2), dtype=jnp.float32)
    refb = jax.block_until_ready(
        _reference(x132b, x119b, w_conv, gamma1, beta1, gamma2, beta2))
    outb = jax.block_until_ready(
        fwd(x132b, x119b, w_conv, gamma1, beta1, gamma2, beta2, tile_p=512))
    assert outb.shape == (1, C_OUT, H2, W2), outb.shape
    err = float(jnp.max(jnp.abs(outb - refb)))
    assert err < tol, f"large-P tiled path mismatch: {err}"

    print("KERNEL_OK")
</pallas_src>

<mosaic_0001>
module attributes {stable_mosaic.version = 11 : i64} {
  func.func @kernel(%arg0: i32, %arg1: memref<112x196xf32, #tpu.memory_space<vmem>>, %arg2: memref<112x196xf32, #tpu.memory_space<vmem>>, %arg3: memref<336x112xbf16, #tpu.memory_space<vmem>>, %arg4: memref<112x1xf32, #tpu.memory_space<vmem>>, %arg5: memref<112x1xf32, #tpu.memory_space<vmem>>, %arg6: memref<336x1xf32, #tpu.memory_space<vmem>>, %arg7: memref<336x1xf32, #tpu.memory_space<vmem>>, %arg8: memref<336x196xf32, #tpu.memory_space<vmem>>) attributes {dimension_semantics = [#tpu.dimension_semantics<parallel>], iteration_bounds = array<i64: 2>, scalar_prefetch = 0 : i64, scratch_operands = 0 : i64, tpu.core_type = #tpu.core_type<tc>, window_params = [{pipeline_mode = #tpu.pipeline_mode<synchronous>, transform_indices = @transform_0, window_bounds = array<i64: 112, 196>}, {pipeline_mode = #tpu.pipeline_mode<synchronous>, transform_indices = @transform_1, window_bounds = array<i64: 112, 196>}, {transform_indices = @transform_2, window_bounds = array<i64: 336, 112>}, {pipeline_mode = #tpu.pipeline_mode<synchronous>, transform_indices = @transform_3, window_bounds = array<i64: 112, 1>}, {pipeline_mode = #tpu.pipeline_mode<synchronous>, transform_indices = @transform_4, window_bounds = array<i64: 112, 1>}, {transform_indices = @transform_5, window_bounds = array<i64: 336, 1>}, {transform_indices = @transform_6, window_bounds = array<i64: 336, 1>}, {transform_indices = @transform_7, window_bounds = array<i64: 336, 196>}]} {
    %c0 = arith.constant 0 : index
    %c0_0 = arith.constant 0 : index
    %0 = vector.load %arg1[%c0, %c0_0] : memref<112x196xf32, #tpu.memory_space<vmem>>, vector<112x196xf32>
    %cst = arith.constant dense<0.000000e+00> : vector<112xf32>
    %1 = vector.multi_reduction <add>, %0, %cst [1] : vector<112x196xf32> to vector<112xf32>
    %2 = vector.shape_cast %1 : vector<112xf32> to vector<112x1xf32>
    %cst_1 = arith.constant 0.00510204071 : f32
    %3 = vector.broadcast %cst_1 : f32 to vector<112x1xf32>
    %4 = arith.mulf %2, %3 : vector<112x1xf32>
    %5 = arith.mulf %0, %0 : vector<112x196xf32>
    %cst_2 = arith.constant dense<0.000000e+00> : vector<112xf32>
    %6 = vector.multi_reduction <add>, %5, %cst_2 [1] : vector<112x196xf32> to vector<112xf32>
    %7 = vector.shape_cast %6 : vector<112xf32> to vector<112x1xf32>
    %cst_3 = arith.constant 0.00510204071 : f32
    %8 = vector.broadcast %cst_3 : f32 to vector<112x1xf32>
    %9 = arith.mulf %7, %8 : vector<112x1xf32>
    %10 = arith.mulf %4, %4 : vector<112x1xf32>
    %11 = arith.subf %9, %10 : vector<112x1xf32>
    %cst_4 = arith.constant 0.000000e+00 : f32
    %12 = vector.broadcast %cst_4 : f32 to vector<112x1xf32>
    %13 = arith.maximumf %11, %12 : vector<112x1xf32>
    %c0_5 = arith.constant 0 : index
    %c0_6 = arith.constant 0 : index
    %14 = vector.load %arg4[%c0_5, %c0_6] : memref<112x1xf32, #tpu.memory_space<vmem>>, vector<112x1xf32>
    %cst_7 = arith.constant 1.000000e-03 : f32
    %15 = vector.broadcast %cst_7 : f32 to vector<112x1xf32>
    %16 = arith.addf %13, %15 : vector<112x1xf32>
    %17 = math.rsqrt %16 : vector<112x1xf32>
    %18 = arith.mulf %14, %17 : vector<112x1xf32>
    %c0_8 = arith.constant 0 : index
    %c0_9 = arith.constant 0 : index
    %19 = vector.load %arg5[%c0_8, %c0_9] : memref<112x1xf32, #tpu.memory_space<vmem>>, vector<112x1xf32>
    %20 = arith.mulf %4, %18 : vector<112x1xf32>
    %21 = arith.subf %19, %20 : vector<112x1xf32>
    %22 = vector.broadcast %18 : vector<112x1xf32> to vector<112x196xf32>
    %23 = arith.mulf %0, %22 : vector<112x196xf32>
    %24 = vector.broadcast %21 : vector<112x1xf32> to vector<112x196xf32>
    %25 = arith.addf %23, %24 : vector<112x196xf32>
    %c0_10 = arith.constant 0 : index
    %c0_11 = arith.constant 0 : index
    %26 = vector.load %arg2[%c0_10, %c0_11] : memref<112x196xf32, #tpu.memory_space<vmem>>, vector<112x196xf32>
    %27 = arith.addf %25, %26 : vector<112x196xf32>
    %c0_12 = arith.constant 0 : index
    %c0_13 = arith.constant 0 : index
    %28 = vector.load %arg3[%c0_12, %c0_13] : memref<336x112xbf16, #tpu.memory_space<vmem>>, vector<336x112xbf16>
    %29 = arith.truncf %27 : vector<112x196xf32> to vector<112x196xbf16>
    %cst_14 = arith.constant dense<0.000000e+00> : vector<336x196xf32>
    %30 = tpu.matmul %28, %29, %cst_14 {dimension_numbers = #tpu.dot_dimension_numbers<[1], [0], [0], [1], [0, 0, 1, 1], [], []>} : vector<336x112xbf16>, vector<112x196xbf16>, vector<336x196xf32> -> vector<336x196xf32>
    %cst_15 = arith.constant dense<0.000000e+00> : vector<336xf32>
    %31 = vector.multi_reduction <add>, %30, %cst_15 [1] : vector<336x196xf32> to vector<336xf32>
    %32 = vector.shape_cast %31 : vector<336xf32> to vector<336x1xf32>
    %cst_16 = arith.constant 0.00510204071 : f32
    %33 = vector.broadcast %cst_16 : f32 to vector<336x1xf32>
    %34 = arith.mulf %32, %33 : vector<336x1xf32>
    %35 = arith.mulf %30, %30 : vector<336x196xf32>
    %cst_17 = arith.constant dense<0.000000e+00> : vector<336xf32>
    %36 = vector.multi_reduction <add>, %35, %cst_17 [1] : vector<336x196xf32> to vector<336xf32>
    %37 = vector.shape_cast %36 : vector<336xf32> to vector<336x1xf32>
    %cst_18 = arith.constant 0.00510204071 : f32
    %38 = vector.broadcast %cst_18 : f32 to vector<336x1xf32>
    %39 = arith.mulf %37, %38 : vector<336x1xf32>
    %40 = arith.mulf %34, %34 : vector<336x1xf32>
    %41 = arith.subf %39, %40 : vector<336x1xf32>
    %cst_19 = arith.constant 0.000000e+00 : f32
    %42 = vector.broadcast %cst_19 : f32 to vector<336x1xf32>
    %43 = arith.maximumf %41, %42 : vector<336x1xf32>
    %c0_20 = arith.constant 0 : index
    %c0_21 = arith.constant 0 : index
    %44 = vector.load %arg6[%c0_20, %c0_21] : memref<336x1xf32, #tpu.memory_space<vmem>>, vector<336x1xf32>
    %cst_22 = arith.constant 1.000000e-03 : f32
    %45 = vector.broadcast %cst_22 : f32 to vector<336x1xf32>
    %46 = arith.addf %43, %45 : vector<336x1xf32>
    %47 = math.rsqrt %46 : vector<336x1xf32>
    %48 = arith.mulf %44, %47 : vector<336x1xf32>
    %c0_23 = arith.constant 0 : index
    %c0_24 = arith.constant 0 : index
    %49 = vector.load %arg7[%c0_23, %c0_24] : memref<336x1xf32, #tpu.memory_space<vmem>>, vector<336x1xf32>
    %50 = arith.mulf %34, %48 : vector<336x1xf32>
    %51 = arith.subf %49, %50 : vector<336x1xf32>
    %52 = vector.broadcast %48 : vector<336x1xf32> to vector<336x196xf32>
    %53 = arith.mulf %30, %52 : vector<336x196xf32>
    %54 = vector.broadcast %51 : vector<336x1xf32> to vector<336x196xf32>
    %55 = arith.addf %53, %54 : vector<336x196xf32>
    %c0_25 = arith.constant 0 : index
    %c0_26 = arith.constant 0 : index
    %56 = vector.load %arg8[%c0_25, %c0_26] : memref<336x196xf32, #tpu.memory_space<vmem>>, vector<336x196xf32>
    tpu.vector_store %arg8[%c0_25, %c0_26], %55 {strides = array<i32>} : memref<336x196xf32, #tpu.memory_space<vmem>>, vector<336x196xf32>,
    return
  }
  func.func @transform_0(%arg0: i32) -> (i32, i32) {
    %c0_i32 = arith.constant 0 : i32
    %c0_i32_0 = arith.constant 0 : i32
    %c0_i32_1 = arith.constant 0 : i32
    return %c0_i32, %c0_i32_0 : i32, i32
  }
  func.func @transform_1(%arg0: i32) -> (i32, i32) {
    %c0_i32 = arith.constant 0 : i32
    %c0_i32_0 = arith.constant 0 : i32
    %c0_i32_1 = arith.constant 0 : i32
    return %c0_i32, %c0_i32_0 : i32, i32
  }
  func.func @transform_2(%arg0: i32) -> (i32, i32) {
    %c0_i32 = arith.constant 0 : i32
    %c0_i32_0 = arith.constant 0 : i32
    return %arg0, %c0_i32 : i32, i32
  }
  func.func @transform_3(%arg0: i32) -> (i32, i32) {
    %c0_i32 = arith.constant 0 : i32
    %c0_i32_0 = arith.constant 0 : i32
    %c0_i32_1 = arith.constant 0 : i32
    return %c0_i32, %c0_i32_0 : i32, i32
  }
  func.func @transform_4(%arg0: i32) -> (i32, i32) {
    %c0_i32 = arith.constant 0 : i32
    %c0_i32_0 = arith.constant 0 : i32
    %c0_i32_1 = arith.constant 0 : i32
    return %c0_i32, %c0_i32_0 : i32, i32
  }
  func.func @transform_5(%arg0: i32) -> (i32, i32) {
    %c0_i32 = arith.constant 0 : i32
    %c0_i32_0 = arith.constant 0 : i32
    return %arg0, %c0_i32 : i32, i32
  }
  func.func @transform_6(%arg0: i32) -> (i32, i32) {
    %c0_i32 = arith.constant 0 : i32
    %c0_i32_0 = arith.constant 0 : i32
    return %arg0, %c0_i32 : i32, i32
  }
  func.func @transform_7(%arg0: i32) -> (i32, i32) {
    %c0_i32 = arith.constant 0 : i32
    %c0_i32_0 = arith.constant 0 : i32
    return %arg0, %c0_i32 : i32, i32
  }
}

</mosaic_0001>

<llo_original>
// kernel: fused_bn_add_conv_bn.1
$region0: #{fused_bn_add_conv_bn.1}
  #allocation0 [shape = 'u32[]', space=smem, size = 0x4, offset = 0x4, fixed_abs, tag = 'smem constant byte address 0x4 - core index']
  #allocation1 [shape = 'u32[144,128]{1,0:T(1,128)}', space=vmem, size = 0x12000, scoped, tag = 'internal scratch']
  %s0 = inlined_call_operand.vmem [shape: f32[112,196], index: 0, kind: input, shape index: {}]
  %s1 = inlined_call_operand.vmem [shape: f32[112,196], index: 1, kind: input, shape index: {}]
  %s2 = inlined_call_operand.vmem [shape: bf16[672,112], index: 2, kind: input, shape index: {}]
  %s3 = inlined_call_operand.vmem [shape: f32[112,1], index: 3, kind: input, shape index: {}]
  %s4 = inlined_call_operand.vmem [shape: f32[112,1], index: 4, kind: input, shape index: {}]
  %s5 = inlined_call_operand.vmem [shape: f32[672,1], index: 5, kind: input, shape index: {}]
  %s6 = inlined_call_operand.vmem [shape: f32[672,1], index: 6, kind: input, shape index: {}]
  %s7 = inlined_call_operand.vmem [shape: f32[672,196], index: 7, kind: output, shape index: {}]
  %s8 = sld [smem:[#allocation0]]
  $region61: #{fused_bn_add_conv_bn.1} parent=0
    _
  %s10 = ssub.s32 1, %s8
  %s11 = scalar_select 0, %s10, %s8
  loop: start=0, step=1, limit=4
  $region2: #{fused_bn_add_conv_bn.1} parent=0 // loop_pre_header
    _
  $region3: #{fused_bn_add_conv_bn.1} parent=0 // loop_header
    %s13 = sphi 0, %s17
    %p14 = scmp.ge.s32.totalorder %s13, 4
    %s21 = sphi 0, %s21
    %s23 = sphi 0, %s21
    %s24 = sphi 0, %s23
    %s38 = sphi 0, %s24
    %s42 = sphi 0, %s42
    %s44 = sphi 0, %s42
    %s45 = sphi 0, %s44
    %s59 = sphi 0, %s45
    %s65 = sphi 0, %s67
    %s68 = sphi 0, %s65
    %s69 = sphi 0, %s68
    %s85 = sphi 0, %s69
    %s89 = sphi 0, %s89
    %s91 = sphi 0, %s89
    %s92 = sphi 0, %s91
    %s106 = sphi 0, %s92
    %s110 = sphi 0, %s110
    %s112 = sphi 0, %s110
    %s113 = sphi 0, %s112
    %s127 = sphi 0, %s113
    %s133 = sphi 0, %s135
    %s136 = sphi 0, %s133
    %s137 = sphi 0, %s136
    %s153 = sphi 0, %s137
    %s159 = sphi 0, %s161
    %s162 = sphi 0, %s159
    %s163 = sphi 0, %s162
    %s179 = sphi 0, %s163
    %s185 = sphi 0, %s187
    %s188 = sphi 0, %s185
    %s189 = sphi 0, %s188
    %s205 = sphi 0, %s189
  $region4: #{fused_bn_add_conv_bn.1} parent=0 // loop_header_branch
    %16 = sbr.rel (%p14) target = $region8
  $region5: #{fused_bn_add_conv_bn.1} parent=0 // loop_body
    %s18 = ssub.s32 %s13, 1
    %s19 = ssub.s32 %s13, 2
    %s20 = sadd.s32 %s13, 1
    %s22 = sadd.s32 %s21, 1
    %p25 = scmp.eq.s32.totalorder %s13, 1
    %p26 = scmp.ne.s32.totalorder %s21, %s23
    %p27 = scmp.eq.s32.totalorder %s13, 0
    %p28 = por %p26, %p27
    %p29 = scmp.ne.s32.totalorder %s21, %s23
    %p30 = scmp.eq.s32.totalorder %s18, 1
    %p31 = por %p29, %p30
    %p32 = scmp.ne.s32.totalorder %s23, %s24
    %p33 = scmp.eq.s32.totalorder %s18, 0
    %p34 = por %p32, %p33
    %p35 = scmp.ne.s32.totalorder %s23, %s24
    %p36 = scmp.eq.s32.totalorder %s19, 1
    %p37 = por %p35, %p36
    %p39 = scmp.ne.s32.totalorder %s24, %s38
    %p40 = scmp.eq.s32.totalorder %s19, 0
    %p41 = por %p39, %p40
    %s43 = sadd.s32 %s42, 1
    %p46 = scmp.eq.s32.totalorder %s13, 1
    %p47 = scmp.ne.s32.totalorder %s42, %s44
    %p48 = scmp.eq.s32.totalorder %s13, 0
    %p49 = por %p47, %p48
    %p50 = scmp.ne.s32.totalorder %s42, %s44
    %p51 = scmp.eq.s32.totalorder %s18, 1
    %p52 = por %p50, %p51
    %p53 = scmp.ne.s32.totalorder %s44, %s45
    %p54 = scmp.eq.s32.totalorder %s18, 0
    %p55 = por %p53, %p54
    %p56 = scmp.ne.s32.totalorder %s44, %s45
    %p57 = scmp.eq.s32.totalorder %s19, 1
    %p58 = por %p56, %p57
    %p60 = scmp.ne.s32.totalorder %s45, %s59
    %p61 = scmp.eq.s32.totalorder %s19, 0
    %p62 = por %p60, %p61
    %s63 = ssub.s32 %s13, %s20
    %p64 = scmp.eq.s32.totalorder %s63, 0
    %s66 = sadd.s32 %s65, 1
    %s67 = scalar_select %p64, %s65, %s66
    %p70 = pneg %p64
    %p71 = scmp.eq.s32.totalorder %s13, 1
    %p72 = por %p70, %p71
    %p73 = scmp.ne.s32.totalorder %s65, %s68
    %p74 = scmp.eq.s32.totalorder %s13, 0
    %p75 = por %p73, %p74
    %p76 = scmp.ne.s32.totalorder %s65, %s68
    %p77 = scmp.eq.s32.totalorder %s18, 1
    %p78 = por %p76, %p77
    %p79 = scmp.ne.s32.totalorder %s68, %s69
    %p80 = scmp.eq.s32.totalorder %s18, 0
    %p81 = por %p79, %p80
    %p82 = scmp.ne.s32.totalorder %s68, %s69
    %p83 = scmp.eq.s32.totalorder %s19, 1
    %p84 = por %p82, %p83
    %p86 = scmp.ne.s32.totalorder %s69, %s85
    %p87 = scmp.eq.s32.totalorder %s19, 0
    %p88 = por %p86, %p87
    %s90 = sadd.s32 %s89, 1
    %p93 = scmp.eq.s32.totalorder %s13, 1
    %p94 = scmp.ne.s32.totalorder %s89, %s91
    %p95 = scmp.eq.s32.totalorder %s13, 0
    %p96 = por %p94, %p95
    %p97 = scmp.ne.s32.totalorder %s89, %s91
    %p98 = scmp.eq.s32.totalorder %s18, 1
    %p99 = por %p97, %p98
    %p100 = scmp.ne.s32.totalorder %s91, %s92
    %p101 = scmp.eq.s32.totalorder %s18, 0
    %p102 = por %p100, %p101
    %p103 = scmp.ne.s32.totalorder %s91, %s92
    %p104 = scmp.eq.s32.totalorder %s19, 1
    %p105 = por %p103, %p104
    %p107 = scmp.ne.s32.totalorder %s92, %s106
    %p108 = scmp.eq.s32.totalorder %s19, 0
    %p109 = por %p107, %p108
    %s111 = sadd.s32 %s110, 1
    %p114 = scmp.eq.s32.totalorder %s13, 1
    %p115 = scmp.ne.s32.totalorder %s110, %s112
    %p116 = scmp.eq.s32.totalorder %s13, 0
    %p117 = por %p115, %p116
    %p118 = scmp.ne.s32.totalorder %s110, %s112
    %p119 = scmp.eq.s32.totalorder %s18, 1
    %p120 = por %p118, %p119
    %p121 = scmp.ne.s32.totalorder %s112, %s113
    %p122 = scmp.eq.s32.totalorder %s18, 0
    %p123 = por %p121, %p122
    %p124 = scmp.ne.s32.totalorder %s112, %s113
    %p125 = scmp.eq.s32.totalorder %s19, 1
    %p126 = por %p124, %p125
    %p128 = scmp.ne.s32.totalorder %s113, %s127
    %p129 = scmp.eq.s32.totalorder %s19, 0
    %p130 = por %p128, %p129
    %s131 = ssub.s32 %s13, %s20
    %p132 = scmp.eq.s32.totalorder %s131, 0
    %s134 = sadd.s32 %s133, 1
    %s135 = scalar_select %p132, %s133, %s134
    %p138 = pneg %p132
    %p139 = scmp.eq.s32.totalorder %s13, 1
    %p140 = por %p138, %p139
    %p141 = scmp.ne.s32.totalorder %s133, %s136
    %p142 = scmp.eq.s32.totalorder %s13, 0
    %p143 = por %p141, %p142
    %p144 = scmp.ne.s32.totalorder %s133, %s136
    %p145 = scmp.eq.s32.totalorder %s18, 1
    %p146 = por %p144, %p145
    %p147 = scmp.ne.s32.totalorder %s136, %s137
    %p148 = scmp.eq.s32.totalorder %s18, 0
    %p149 = por %p147, %p148
    %p150 = scmp.ne.s32.totalorder %s136, %s137
    %p151 = scmp.eq.s32.totalorder %s19, 1
    %p152 = por %p150, %p151
    %p154 = scmp.ne.s32.totalorder %s137, %s153
    %p155 = scmp.eq.s32.totalorder %s19, 0
    %p156 = por %p154, %p155
    %s157 = ssub.s32 %s13, %s20
    %p158 = scmp.eq.s32.totalorder %s157, 0
    %s160 = sadd.s32 %s159, 1
    %s161 = scalar_select %p158, %s159, %s160
    %p164 = pneg %p158
    %p165 = scmp.eq.s32.totalorder %s13, 1
    %p166 = por %p164, %p165
    %p167 = scmp.ne.s32.totalorder %s159, %s162
    %p168 = scmp.eq.s32.totalorder %s13, 0
    %p169 = por %p167, %p168
    %p170 = scmp.ne.s32.totalorder %s159, %s162
    %p171 = scmp.eq.s32.totalorder %s18, 1
    %p172 = por %p170, %p171
    %p173 = scmp.ne.s32.totalorder %s162, %s163
    %p174 = scmp.eq.s32.totalorder %s18, 0
    %p175 = por %p173, %p174
    %p176 = scmp.ne.s32.totalorder %s162, %s163
    %p177 = scmp.eq.s32.totalorder %s19, 1
    %p178 = por %p176, %p177
    %p180 = scmp.ne.s32.totalorder %s163, %s179
    %p181 = scmp.eq.s32.totalorder %s19, 0
    %p182 = por %p180, %p181
    %s183 = ssub.s32 %s13, %s20
    %p184 = scmp.eq.s32.totalorder %s183, 0
    %s186 = sadd.s32 %s185, 1
    %s187 = scalar_select %p184, %s185, %s186
    %p190 = pneg %p184
    %p191 = scmp.eq.s32.totalorder %s13, 1
    %p192 = por %p190, %p191
    %p193 = scmp.ne.s32.totalorder %s185, %s188
    %p194 = scmp.eq.s32.totalorder %s13, 0
    %p195 = por %p193, %p194
    %p196 = scmp.ne.s32.totalorder %s185, %s188
    %p197 = scmp.eq.s32.totalorder %s18, 1
    %p198 = por %p196, %p197
    %p199 = scmp.ne.s32.totalorder %s188, %s189
    %p200 = scmp.eq.s32.totalorder %s18, 0
    %p201 = por %p199, %p200
    %p202 = scmp.ne.s32.totalorder %s188, %s189
    %p203 = scmp.eq.s32.totalorder %s19, 1
    %p204 = por %p202, %p203
    %p206 = scmp.ne.s32.totalorder %s189, %s205
    %p207 = scmp.eq.s32.totalorder %s19, 0
    %p208 = por %p206, %p207
    %p209 = scmp.le.s32.totalorder 1, %s13
    %p210 = scmp.lt.s32.totalorder %s13, 3
    %p211 = pnand %p209, %p210
    %p212 = pneg %p211
    // Predicated region
    $region9: #{fused_bn_add_conv_bn.1} parent=5 // pred_check
      _
    $region10: #{fused_bn_add_conv_bn.1} parent=5 // pred_check_branch
      %214 = sbr.rel (%p211) target = $region12
    $region11: #{fused_bn_add_conv_bn.1} parent=5 // pred_region
      %s215 = ssub.s32 %s13, 1
      // Predicated region
      $region13: #{fused_bn_add_conv_bn.1} parent=11 // pred_check
        %p216 = pneg %p34
      $region14: #{fused_bn_add_conv_bn.1} parent=11 // pred_check_branch
        %218 = sbr.rel (%p216) target = $region16
      $region15: #{fused_bn_add_conv_bn.1} parent=11 // pred_region
        _
      $region16: #{fused_bn_add_conv_bn.1} parent=11 // pred_fallthru
        _
      // Predicated region
      $region17: #{fused_bn_add_conv_bn.1} parent=11 // pred_check
        %p219 = pneg %p55
      $region18: #{fused_bn_add_conv_bn.1} parent=11 // pred_check_branch
        %221 = sbr.rel (%p219) target = $region20
      $region19: #{fused_bn_add_conv_bn.1} parent=11 // pred_region
        _
      $region20: #{fused_bn_add_conv_bn.1} parent=11 // pred_fallthru
        _
      // Predicated region
      $region21: #{fused_bn_add_conv_bn.1} parent=11 // pred_check
        %p222 = pneg %p102
      $region22: #{fused_bn_add_conv_bn.1} parent=11 // pred_check_branch
        %224 = sbr.rel (%p222) target = $region24
      $region23: #{fused_bn_add_conv_bn.1} parent=11 // pred_region
        _
      $region24: #{fused_bn_add_conv_bn.1} parent=11 // pred_fallthru
        _
      // Predicated region
      $region25: #{fused_bn_add_conv_bn.1} parent=11 // pred_check
        %p225 = pneg %p123
      $region26: #{fused_bn_add_conv_bn.1} parent=11 // pred_check_branch
        %227 = sbr.rel (%p225) target = $region28
      $region27: #{fused_bn_add_conv_bn.1} parent=11 // pred_region
        _
      $region28: #{fused_bn_add_conv_bn.1} parent=11 // pred_fallthru
        _
    $region12: #{fused_bn_add_conv_bn.1} parent=5 // pred_fallthru
      _
    %p228 = scmp.lt.s32.totalorder %s13, 2
    // Predicated region
    $region29: #{fused_bn_add_conv_bn.1} parent=5 // pred_check
      %p229 = pneg %p228
    $region30: #{fused_bn_add_conv_bn.1} parent=5 // pred_check_branch
      %231 = sbr.rel (%p229) target = $region32
    $region31: #{fused_bn_add_conv_bn.1} parent=5 // pred_region
      // Predicated region
      $region33: #{fused_bn_add_conv_bn.1} parent=31 // pred_check
        %p232 = pneg %p75
      $region34: #{fused_bn_add_conv_bn.1} parent=31 // pred_check_branch
        %234 = sbr.rel (%p232) target = $region36
      $region35: #{fused_bn_add_conv_bn.1} parent=31 // pred_region
        %s235 = smul.u32 42, %s13
        %p236 = scmp.lt.s32.totalorder %s235, 83
        %s237 = scalar_select %p236, %s235, 83
        %s238 = smul.addr %s237, 4
        %s239 = scalar_lea.vmem %s2, %s238
        %s240 = smul.u32 42, %s13
      $region36: #{fused_bn_add_conv_bn.1} parent=31 // pred_fallthru
        _
      // Predicated region
      $region37: #{fused_bn_add_conv_bn.1} parent=31 // pred_check
        %p241 = pneg %p143
      $region38: #{fused_bn_add_conv_bn.1} parent=31 // pred_check_branch
        %243 = sbr.rel (%p241) target = $region40
      $region39: #{fused_bn_add_conv_bn.1} parent=31 // pred_region
        %s244 = smul.u32 42, %s13
        %p245 = scmp.lt.s32.totalorder %s244, 83
        %s246 = scalar_select %p245, %s244, 83
        %s247 = smul.addr %s246, 8
        %s248 = scalar_lea.vmem %s5, %s247
        %s249 = smul.u32 42, %s13
      $region40: #{fused_bn_add_conv_bn.1} parent=31 // pred_fallthru
        _
      // Predicated region
      $region41: #{fused_bn_add_conv_bn.1} parent=31 // pred_check
        %p250 = pneg %p169
      $region42: #{fused_bn_add_conv_bn.1} parent=31 // pred_check_branch
        %252 = sbr.rel (%p250) target = $region44
      $region43: #{fused_bn_add_conv_bn.1} parent=31 // pred_region
        %s253 = smul.u32 42, %s13
        %p254 = scmp.lt.s32.totalorder %s253, 83
        %s255 = scalar_select %p254, %s253, 83
        %s256 = smul.addr %s255, 8
        %s257 = scalar_lea.vmem %s6, %s256
        %s258 = smul.u32 42, %s13
      $region44: #{fused_bn_add_conv_bn.1} parent=31 // pred_fallthru
        _
    $region32: #{fused_bn_add_conv_bn.1} parent=5 // pred_fallthru
      _
    %p259 = scmp.le.s32.totalorder 1, %s13
    %p260 = scmp.lt.s32.totalorder %s13, 3
    %p261 = pnand %p259, %p260
    %p262 = pneg %p261
    // Predicated region
    $region45: #{fused_bn_add_conv_bn.1} parent=5 // pred_check
      _
    $region46: #{fused_bn_add_conv_bn.1} parent=5 // pred_check_branch
      %264 = sbr.rel (%p261) target = $region48
    $region47: #{fused_bn_add_conv_bn.1} parent=5 // pred_region
      %s265 = ssub.s32 %s13, 1
      %p266 = pneg %p34
      %p267 = pneg %p31
      %p268 = pneg %p55
      %p269 = pneg %p52
      %s270 = smul.u32 42, %s18
      %p271 = scmp.lt.s32.totalorder %s270, 83
      %s272 = scalar_select %p271, %s270, 83
      %s273 = smul.addr %s272, 4
      %s274 = scalar_lea.vmem %s2, %s273
      %p275 = pneg %p81
      %p276 = pneg %p78
      %p277 = pneg %p102
      %p278 = pneg %p99
      %p279 = pneg %p123
      %p280 = pneg %p120
      %s281 = smul.u32 42, %s18
      %p282 = scmp.lt.s32.totalorder %s281, 83
      %s283 = scalar_select %p282, %s281, 83
      %s284 = smul.addr %s283, 8
      %s285 = scalar_lea.vmem %s5, %s284
      %p286 = pneg %p149
      %p287 = pneg %p146
      %s288 = smul.u32 42, %s18
      %p289 = scmp.lt.s32.totalorder %s288, 83
      %s290 = scalar_select %p289, %s288, 83
      %s291 = smul.addr %s290, 8
      %s292 = scalar_lea.vmem %s6, %s291
      %p293 = pneg %p175
      %p294 = pneg %p172
      %p295 = pneg %p201
      %p296 = pneg %p198
      %s297 = smul.u32 42, %s18
      %p298 = scmp.lt.s32.totalorder %s297, 83
      %s299 = scalar_select %p298, %s297, 83
      %s300 = smul.addr %s299, 2
      %s301 = smul.addr %s300, 8
      %s302 = scalar_lea.vmem %s7, %s301
      %s303 = smul.u32 42, %s18
      %p304 = scmp.lt.s32.totalorder %s303, 83
      %s305 = scalar_select %p304, %s303, 83
      %s306 = smul.addr %s305, 4
      %s307 = scalar_lea.vmem %s2, %s306
      %s308 = smul.u32 42, %s18
      %s309 = smul.u32 42, %s18
      %p310 = scmp.lt.s32.totalorder %s309, 83
      %s311 = scalar_select %p310, %s309, 83
      %s312 = smul.addr %s311, 8
      %s313 = scalar_lea.vmem %s5, %s312
      %s314 = smul.u32 42, %s18
      %s315 = smul.u32 42, %s18
      %p316 = scmp.lt.s32.totalorder %s315, 83
      %s317 = scalar_select %p316, %s315, 83
      %s318 = smul.addr %s317, 8
      %s319 = scalar_lea.vmem %s6, %s318
      %s320 = smul.u32 42, %s18
      %s321 = smul.u32 42, %s18
      %p322 = scmp.lt.s32.totalorder %s321, 83
      %s323 = scalar_select %p322, %s321, 83
      %s324 = smul.addr %s323, 2
      %s325 = smul.addr %s324, 8
      %s326 = scalar_lea.vmem %s7, %s325
      %s327 = smul.u32 42, %s18
      %v329 = vld [vmem:[%s0] sm:$0xff]
      %v330 = vld [vmem:[%s0 + $0x8] sm:$0xff]
      %v331 = vld [vmem:[%s0 + $0x10] sm:$0xff]
      %v332 = vld [vmem:[%s0 + $0x18] sm:$0xff]
      %v333 = vld [vmem:[%s0 + $0x20] sm:$0xff]
      %v334 = vld [vmem:[%s0 + $0x28] sm:$0xff]
      %v335 = vld [vmem:[%s0 + $0x30] sm:$0xff]
      %v336 = vld [vmem:[%s0 + $0x38] sm:$0xff]
      %v337 = vld [vmem:[%s0 + $0x40] sm:$0xff]
      %v338 = vld [vmem:[%s0 + $0x48] sm:$0xff]
      %v339 = vld [vmem:[%s0 + $0x50] sm:$0xff]
      %v340 = vld [vmem:[%s0 + $0x58] sm:$0xff]
      %v341 = vld [vmem:[%s0 + $0x60] sm:$0xff]
      %v342 = vld [vmem:[%s0 + $0x68] sm:$0xff]
      %v343 = vld [vmem:[%s0 + $0x70] sm:$0xff]
      %v344 = vld [vmem:[%s0 + $0x78] sm:$0xff]
      %v345 = vld [vmem:[%s0 + $0x80] sm:$0xff]
      %v346 = vld [vmem:[%s0 + $0x88] sm:$0xff]
      %v347 = vld [vmem:[%s0 + $0x90] sm:$0xff]
      %v348 = vld [vmem:[%s0 + $0x98] sm:$0xff]
      %v349 = vld [vmem:[%s0 + $0xa0] sm:$0xff]
      %v350 = vld [vmem:[%s0 + $0xa8] sm:$0xff]
      %v351 = vld [vmem:[%s0 + $0xb0] sm:$0xff]
      %v352 = vld [vmem:[%s0 + $0xb8] sm:$0xff]
      %v353 = vld [vmem:[%s0 + $0xc0] sm:$0xff]
      %v354 = vld [vmem:[%s0 + $0xc8] sm:$0xff]
      %v355 = vld [vmem:[%s0 + $0xd0] sm:$0xff]
      %v356 = vld [vmem:[%s0 + $0xd8] sm:$0xff]
      %vm357 = vcmask 556032
      %v358 = vsel %vm357, %v330, 0.0
      %v359 = vadd.f32 %v329, %v358
      %360 = vadd.xlane.f32.xlu0 %v359
      %v361 = vpop.xlane.xlu0 %360
      %v362 = vsel %vm357, %v332, 0.0
      %v363 = vadd.f32 %v331, %v362
      %364 = vadd.xlane.f32.xlu0 %v363
      %v365 = vpop.xlane.xlu0 %364
      %v366 = vsel %vm357, %v334, 0.0
      %v367 = vadd.f32 %v333, %v366
      %368 = vadd.xlane.f32.xlu0 %v367
      %v369 = vpop.xlane.xlu0 %368
      %v370 = vsel %vm357, %v336, 0.0
      %v371 = vadd.f32 %v335, %v370
      %372 = vadd.xlane.f32.xlu0 %v371
      %v373 = vpop.xlane.xlu0 %372
      %v374 = vsel %vm357, %v338, 0.0
      %v375 = vadd.f32 %v337, %v374
      %376 = vadd.xlane.f32.xlu0 %v375
      %v377 = vpop.xlane.xlu0 %376
      %v378 = vsel %vm357, %v340, 0.0
      %v379 = vadd.f32 %v339, %v378
      %380 = vadd.xlane.f32.xlu0 %v379
      %v381 = vpop.xlane.xlu0 %380
      %v382 = vsel %vm357, %v342, 0.0
      %v383 = vadd.f32 %v341, %v382
      %384 = vadd.xlane.f32.xlu0 %v383
      %v385 = vpop.xlane.xlu0 %384
      %v386 = vsel %vm357, %v344, 0.0
      %v387 = vadd.f32 %v343, %v386
      %388 = vadd.xlane.f32.xlu0 %v387
      %v389 = vpop.xlane.xlu0 %388
      %v390 = vsel %vm357, %v346, 0.0
      %v391 = vadd.f32 %v345, %v390
      %392 = vadd.xlane.f32.xlu0 %v391
      %v393 = vpop.xlane.xlu0 %392
      %v394 = vsel %vm357, %v348, 0.0
      %v395 = vadd.f32 %v347, %v394
      %396 = vadd.xlane.f32.xlu0 %v395
      %v397 = vpop.xlane.xlu0 %396
      %v398 = vsel %vm357, %v350, 0.0
      %v399 = vadd.f32 %v349, %v398
      %400 = vadd.xlane.f32.xlu0 %v399
      %v401 = vpop.xlane.xlu0 %400
      %v402 = vsel %vm357, %v352, 0.0
      %v403 = vadd.f32 %v351, %v402
      %404 = vadd.xlane.f32.xlu0 %v403
      %v405 = vpop.xlane.xlu0 %404
      %v406 = vsel %vm357, %v354, 0.0
      %v407 = vadd.f32 %v353, %v406
      %408 = vadd.xlane.f32.xlu0 %v407
      %v409 = vpop.xlane.xlu0 %408
      %v410 = vsel %vm357, %v356, 0.0
      %v411 = vadd.f32 %v355, %v410
      %412 = vadd.xlane.f32.xlu0 %v411
      %v413 = vpop.xlane.xlu0 %412
      %v414 = vmul.f32 %v361, 0.0051020407
      %v415 = vmul.f32 %v365, 0.0051020407
      %v416 = vmul.f32 %v369, 0.0051020407
      %v417 = vmul.f32 %v373, 0.0051020407
      %v418 = vmul.f32 %v377, 0.0051020407
      %v419 = vmul.f32 %v381, 0.0051020407
      %v420 = vmul.f32 %v385, 0.0051020407
      %v421 = vmul.f32 %v389, 0.0051020407
      %v422 = vmul.f32 %v393, 0.0051020407
      %v423 = vmul.f32 %v397, 0.0051020407
      %v424 = vmul.f32 %v401, 0.0051020407
      %v425 = vmul.f32 %v405, 0.0051020407
      %v426 = vmul.f32 %v409, 0.0051020407
      %v427 = vmul.f32 %v413, 0.0051020407
      %v428 = vmul.f32 %v329, %v329
      %v429 = vmul.f32 %v330, %v330
      %v430 = vmul.f32 %v331, %v331
      %v431 = vmul.f32 %v332, %v332
      %v432 = vmul.f32 %v333, %v333
      %v433 = vmul.f32 %v334, %v334
      %v434 = vmul.f32 %v335, %v335
      %v435 = vmul.f32 %v336, %v336
      %v436 = vmul.f32 %v337, %v337
      %v437 = vmul.f32 %v338, %v338
      %v438 = vmul.f32 %v339, %v339
      %v439 = vmul.f32 %v340, %v340
      %v440 = vmul.f32 %v341, %v341
      %v441 = vmul.f32 %v342, %v342
      %v442 = vmul.f32 %v343, %v343
      %v443 = vmul.f32 %v344, %v344
      %v444 = vmul.f32 %v345, %v345
      %v445 = vmul.f32 %v346, %v346
      %v446 = vmul.f32 %v347, %v347
      %v447 = vmul.f32 %v348, %v348
      %v448 = vmul.f32 %v349, %v349
      %v449 = vmul.f32 %v350, %v350
      %v450 = vmul.f32 %v351, %v351
      %v451 = vmul.f32 %v352, %v352
      %v452 = vmul.f32 %v353, %v353
      %v453 = vmul.f32 %v354, %v354
      %v454 = vmul.f32 %v355, %v355
      %v455 = vmul.f32 %v356, %v356
      %v456 = vsel %vm357, %v429, 0.0
      %v457 = vadd.f32 %v428, %v456
      %458 = vadd.xlane.f32.xlu0 %v457
      %v459 = vpop.xlane.xlu0 %458
      %v460 = vsel %vm357, %v431, 0.0
      %v461 = vadd.f32 %v430, %v460
      %462 = vadd.xlane.f32.xlu0 %v461
      %v463 = vpop.xlane.xlu0 %462
      %v464 = vsel %vm357, %v433, 0.0
      %v465 = vadd.f32 %v432, %v464
      %466 = vadd.xlane.f32.xlu0 %v465
      %v467 = vpop.xlane.xlu0 %466
      %v468 = vsel %vm357, %v435, 0.0
      %v469 = vadd.f32 %v434, %v468
      %470 = vadd.xlane.f32.xlu0 %v469
      %v471 = vpop.xlane.xlu0 %470
      %v472 = vsel %vm357, %v437, 0.0
      %v473 = vadd.f32 %v436, %v472
      %474 = vadd.xlane.f32.xlu0 %v473
      %v475 = vpop.xlane.xlu0 %474
      %v476 = vsel %vm357, %v439, 0.0
      %v477 = vadd.f32 %v438, %v476
      %478 = vadd.xlane.f32.xlu0 %v477
      %v479 = vpop.xlane.xlu0 %478
      %v480 = vsel %vm357, %v441, 0.0
      %v481 = vadd.f32 %v440, %v480
      %482 = vadd.xlane.f32.xlu0 %v481
      %v483 = vpop.xlane.xlu0 %482
      %v484 = vsel %vm357, %v443, 0.0
      %v485 = vadd.f32 %v442, %v484
      %486 = vadd.xlane.f32.xlu0 %v485
      %v487 = vpop.xlane.xlu0 %486
      %v488 = vsel %vm357, %v445, 0.0
      %v489 = vadd.f32 %v444, %v488
      %490 = vadd.xlane.f32.xlu0 %v489
      %v491 = vpop.xlane.xlu0 %490
      %v492 = vsel %vm357, %v447, 0.0
      %v493 = vadd.f32 %v446, %v492
      %494 = vadd.xlane.f32.xlu0 %v493
      %v495 = vpop.xlane.xlu0 %494
      %v496 = vsel %vm357, %v449, 0.0
      %v497 = vadd.f32 %v448, %v496
      %498 = vadd.xlane.f32.xlu0 %v497
      %v499 = vpop.xlane.xlu0 %498
      %v500 = vsel %vm357, %v451, 0.0
      %v501 = vadd.f32 %v450, %v500
      %502 = vadd.xlane.f32.xlu0 %v501
      %v503 = vpop.xlane.xlu0 %502
      %v504 = vsel %vm357, %v453, 0.0
      %v505 = vadd.f32 %v452, %v504
      %506 = vadd.xlane.f32.xlu0 %v505
      %v507 = vpop.xlane.xlu0 %506
      %v508 = vsel %vm357, %v455, 0.0
      %v509 = vadd.f32 %v454, %v508
      %510 = vadd.xlane.f32.xlu0 %v509
      %v511 = vpop.xlane.xlu0 %510
      %v512 = vmul.f32 %v459, 0.0051020407
      %v513 = vmul.f32 %v463, 0.0051020407
      %v514 = vmul.f32 %v467, 0.0051020407
      %v515 = vmul.f32 %v471, 0.0051020407
      %v516 = vmul.f32 %v475, 0.0051020407
      %v517 = vmul.f32 %v479, 0.0051020407
      %v518 = vmul.f32 %v483, 0.0051020407
      %v519 = vmul.f32 %v487, 0.0051020407
      %v520 = vmul.f32 %v491, 0.0051020407
      %v521 = vmul.f32 %v495, 0.0051020407
      %v522 = vmul.f32 %v499, 0.0051020407
      %v523 = vmul.f32 %v503, 0.0051020407
      %v524 = vmul.f32 %v507, 0.0051020407
      %v525 = vmul.f32 %v511, 0.0051020407
      %v526 = vmul.f32 %v414, %v414
      %v527 = vmul.f32 %v415, %v415
      %v528 = vmul.f32 %v416, %v416
      %v529 = vmul.f32 %v417, %v417
      %v530 = vmul.f32 %v418, %v418
      %v531 = vmul.f32 %v419, %v419
      %v532 = vmul.f32 %v420, %v420
      %v533 = vmul.f32 %v421, %v421
      %v534 = vmul.f32 %v422, %v422
      %v535 = vmul.f32 %v423, %v423
      %v536 = vmul.f32 %v424, %v424
      %v537 = vmul.f32 %v425, %v425
      %v538 = vmul.f32 %v426, %v426
      %v539 = vmul.f32 %v427, %v427
      %v540 = vsub.f32 %v512, %v526
      %v541 = vsub.f32 %v513, %v527
      %v542 = vsub.f32 %v514, %v528
      %v543 = vsub.f32 %v515, %v529
      %v544 = vsub.f32 %v516, %v530
      %v545 = vsub.f32 %v517, %v531
      %v546 = vsub.f32 %v518, %v532
      %v547 = vsub.f32 %v519, %v533
      %v548 = vsub.f32 %v520, %v534
      %v549 = vsub.f32 %v521, %v535
      %v550 = vsub.f32 %v522, %v536
      %v551 = vsub.f32 %v523, %v537
      %v552 = vsub.f32 %v524, %v538
      %v553 = vsub.f32 %v525, %v539
      %v554 = vmax.f32 %v540, 0.0
      %v555 = vmax.f32 %v541, 0.0
      %v556 = vmax.f32 %v542, 0.0
      %v557 = vmax.f32 %v543, 0.0
      %v558 = vmax.f32 %v544, 0.0
      %v559 = vmax.f32 %v545, 0.0
      %v560 = vmax.f32 %v546, 0.0
      %v561 = vmax.f32 %v547, 0.0
      %v562 = vmax.f32 %v548, 0.0
      %v563 = vmax.f32 %v549, 0.0
      %v564 = vmax.f32 %v550, 0.0
      %v565 = vmax.f32 %v551, 0.0
      %v566 = vmax.f32 %v552, 0.0
      %v567 = vmax.f32 %v553, 0.0
      %v568 = vld [vmem:[%s3] sm:$0xff]
      %v569 = vld [vmem:[%s3 + $0x8] sm:$0xff]
      %v570 = vld [vmem:[%s3 + $0x10] sm:$0xff]
      %v571 = vld [vmem:[%s3 + $0x18] sm:$0xff]
      %v572 = vld [vmem:[%s3 + $0x20] sm:$0xff]
      %v573 = vld [vmem:[%s3 + $0x28] sm:$0xff]
      %v574 = vld [vmem:[%s3 + $0x30] sm:$0xff]
      %v575 = vld [vmem:[%s3 + $0x38] sm:$0xff]
      %v576 = vld [vmem:[%s3 + $0x40] sm:$0xff]
      %v577 = vld [vmem:[%s3 + $0x48] sm:$0xff]
      %v578 = vld [vmem:[%s3 + $0x50] sm:$0xff]
      %v579 = vld [vmem:[%s3 + $0x58] sm:$0xff]
      %v580 = vld [vmem:[%s3 + $0x60] sm:$0xff]
      %v581 = vld [vmem:[%s3 + $0x68] sm:$0xff]
      %v582 = vadd.f32 %v554, 0.001
      %v583 = vadd.f32 %v555, 0.001
      %v584 = vadd.f32 %v556, 0.001
      %v585 = vadd.f32 %v557, 0.001
      %v586 = vadd.f32 %v558, 0.001
      %v587 = vadd.f32 %v559, 0.001
      %v588 = vadd.f32 %v560, 0.001
      %v589 = vadd.f32 %v561, 0.001
      %v590 = vadd.f32 %v562, 0.001
      %v591 = vadd.f32 %v563, 0.001
      %v592 = vadd.f32 %v564, 0.001
      %v593 = vadd.f32 %v565, 0.001
      %v594 = vadd.f32 %v566, 0.001
      %v595 = vadd.f32 %v567, 0.001
      %v596 = vrsqrt.pop %v582
      %v597 = vrsqrt.pop %v583
      %v598 = vrsqrt.pop %v584
      %v599 = vrsqrt.pop %v585
      %v600 = vrsqrt.pop %v586
      %v601 = vrsqrt.pop %v587
      %v602 = vrsqrt.pop %v588
      %v603 = vrsqrt.pop %v589
      %v604 = vrsqrt.pop %v590
      %v605 = vrsqrt.pop %v591
      %v606 = vrsqrt.pop %v592
      %v607 = vrsqrt.pop %v593
      %v608 = vrsqrt.pop %v594
      %v609 = vrsqrt.pop %v595
      %v610 = vmul.f32 %v568, %v596
      %v611 = vmul.f32 %v569, %v597
      %v612 = vmul.f32 %v570, %v598
      %v613 = vmul.f32 %v571, %v599
      %v614 = vmul.f32 %v572, %v600
      %v615 = vmul.f32 %v573, %v601
      %v616 = vmul.f32 %v574, %v602
      %v617 = vmul.f32 %v575, %v603
      %v618 = vmul.f32 %v576, %v604
      %v619 = vmul.f32 %v577, %v605
      %v620 = vmul.f32 %v578, %v606
      %v621 = vmul.f32 %v579, %v607
      %v622 = vmul.f32 %v580, %v608
      %v623 = vmul.f32 %v581, %v609
      %v624 = vld [vmem:[%s4] sm:$0xff]
      %v625 = vld [vmem:[%s4 + $0x8] sm:$0xff]
      %v626 = vld [vmem:[%s4 + $0x10] sm:$0xff]
      %v627 = vld [vmem:[%s4 + $0x18] sm:$0xff]
      %v628 = vld [vmem:[%s4 + $0x20] sm:$0xff]
      %v629 = vld [vmem:[%s4 + $0x28] sm:$0xff]
      %v630 = vld [vmem:[%s4 + $0x30] sm:$0xff]
      %v631 = vld [vmem:[%s4 + $0x38] sm:$0xff]
      %v632 = vld [vmem:[%s4 + $0x40] sm:$0xff]
      %v633 = vld [vmem:[%s4 + $0x48] sm:$0xff]
      %v634 = vld [vmem:[%s4 + $0x50] sm:$0xff]
      %v635 = vld [vmem:[%s4 + $0x58] sm:$0xff]
      %v636 = vld [vmem:[%s4 + $0x60] sm:$0xff]
      %v637 = vld [vmem:[%s4 + $0x68] sm:$0xff]
      %v638 = vmul.f32 %v414, %v610
      %v639 = vmul.f32 %v415, %v611
      %v640 = vmul.f32 %v416, %v612
      %v641 = vmul.f32 %v417, %v613
      %v642 = vmul.f32 %v418, %v614
      %v643 = vmul.f32 %v419, %v615
      %v644 = vmul.f32 %v420, %v616
      %v645 = vmul.f32 %v421, %v617
      %v646 = vmul.f32 %v422, %v618
      %v647 = vmul.f32 %v423, %v619
      %v648 = vmul.f32 %v424, %v620
      %v649 = vmul.f32 %v425, %v621
      %v650 = vmul.f32 %v426, %v622
      %v651 = vmul.f32 %v427, %v623
      %v652 = vsub.f32 %v624, %v638
      %v653 = vsub.f32 %v625, %v639
      %v654 = vsub.f32 %v626, %v640
      %v655 = vsub.f32 %v627, %v641
      %v656 = vsub.f32 %v628, %v642
      %v657 = vsub.f32 %v629, %v643
      %v658 = vsub.f32 %v630, %v644
      %v659 = vsub.f32 %v631, %v645
      %v660 = vsub.f32 %v632, %v646
      %v661 = vsub.f32 %v633, %v647
      %v662 = vsub.f32 %v634, %v648
      %v663 = vsub.f32 %v635, %v649
      %v664 = vsub.f32 %v636, %v650
      %v665 = vsub.f32 %v637, %v651
      %667 = vset.pattern.permute.xlu0 0
      %668 = vperm.xlu0 %667, %v610
      %v669 = vpop.permute.xlu0 %668
      %672 = vset.pattern.permute.xlu0 0
      %673 = vperm.xlu0 %672, %v611
      %v674 = vpop.permute.xlu0 %673
      %677 = vset.pattern.permute.xlu0 0
      %678 = vperm.xlu0 %677, %v612
      %v679 = vpop.permute.xlu0 %678
      %682 = vset.pattern.permute.xlu0 0
      %683 = vperm.xlu0 %682, %v613
      %v684 = vpop.permute.xlu0 %683
      %687 = vset.pattern.permute.xlu0 0
      %688 = vperm.xlu0 %687, %v614
      %v689 = vpop.permute.xlu0 %688
      %692 = vset.pattern.permute.xlu0 0
      %693 = vperm.xlu0 %692, %v615
      %v694 = vpop.permute.xlu0 %693
      %697 = vset.pattern.permute.xlu0 0
      %698 = vperm.xlu0 %697, %v616
      %v699 = vpop.permute.xlu0 %698
      %702 = vset.pattern.permute.xlu0 0
      %703 = vperm.xlu0 %702, %v617
      %v704 = vpop.permute.xlu0 %703
      %707 = vset.pattern.permute.xlu0 0
      %708 = vperm.xlu0 %707, %v618
      %v709 = vpop.permute.xlu0 %708
      %712 = vset.pattern.permute.xlu0 0
      %713 = vperm.xlu0 %712, %v619
      %v714 = vpop.permute.xlu0 %713
      %717 = vset.pattern.permute.xlu0 0
      %718 = vperm.xlu0 %717, %v620
      %v719 = vpop.permute.xlu0 %718
      %722 = vset.pattern.permute.xlu0 0
      %723 = vperm.xlu0 %722, %v621
      %v724 = vpop.permute.xlu0 %723
      %727 = vset.pattern.permute.xlu0 0
      %728 = vperm.xlu0 %727, %v622
      %v729 = vpop.permute.xlu0 %728
      %732 = vset.pattern.permute.xlu0 0
      %733 = vperm.xlu0 %732, %v623
      %v734 = vpop.permute.xlu0 %733
      %v736 = vmul.f32 %v329, %v669
      %v737 = vmul.f32 %v330, %v669
      %v738 = vmul.f32 %v331, %v674
      %v739 = vmul.f32 %v332, %v674
      %v740 = vmul.f32 %v333, %v679
      %v741 = vmul.f32 %v334, %v679
      %v742 = vmul.f32 %v335, %v684
      %v743 = vmul.f32 %v336, %v684
      %v744 = vmul.f32 %v337, %v689
      %v745 = vmul.f32 %v338, %v689
      %v746 = vmul.f32 %v339, %v694
      %v747 = vmul.f32 %v340, %v694
      %v748 = vmul.f32 %v341, %v699
      %v749 = vmul.f32 %v342, %v699
      %v750 = vmul.f32 %v343, %v704
      %v751 = vmul.f32 %v344, %v704
      %v752 = vmul.f32 %v345, %v709
      %v753 = vmul.f32 %v346, %v709
      %v754 = vmul.f32 %v347, %v714
      %v755 = vmul.f32 %v348, %v714
      %v756 = vmul.f32 %v349, %v719
      %v757 = vmul.f32 %v350, %v719
      %v758 = vmul.f32 %v351, %v724
      %v759 = vmul.f32 %v352, %v724
      %v760 = vmul.f32 %v353, %v729
      %v761 = vmul.f32 %v354, %v729
      %v762 = vmul.f32 %v355, %v734
      %v763 = vmul.f32 %v356, %v734
      %765 = vset.pattern.permute.xlu0 0
      %766 = vperm.xlu0 %765, %v652
      %v767 = vpop.permute.xlu0 %766
      %770 = vset.pattern.permute.xlu0 0
      %771 = vperm.xlu0 %770, %v653
      %v772 = vpop.permute.xlu0 %771
      %775 = vset.pattern.permute.xlu0 0
      %776 = vperm.xlu0 %775, %v654
      %v777 = vpop.permute.xlu0 %776
      %780 = vset.pattern.permute.xlu0 0
      %781 = vperm.xlu0 %780, %v655
      %v782 = vpop.permute.xlu0 %781
      %785 = vset.pattern.permute.xlu0 0
      %786 = vperm.xlu0 %785, %v656
      %v787 = vpop.permute.xlu0 %786
      %790 = vset.pattern.permute.xlu0 0
      %791 = vperm.xlu0 %790, %v657
      %v792 = vpop.permute.xlu0 %791
      %795 = vset.pattern.permute.xlu0 0
      %796 = vperm.xlu0 %795, %v658
      %v797 = vpop.permute.xlu0 %796
      %800 = vset.pattern.permute.xlu0 0
      %801 = vperm.xlu0 %800, %v659
      %v802 = vpop.permute.xlu0 %801
      %805 = vset.pattern.permute.xlu0 0
      %806 = vperm.xlu0 %805, %v660
      %v807 = vpop.permute.xlu0 %806
      %810 = vset.pattern.permute.xlu0 0
      %811 = vperm.xlu0 %810, %v661
      %v812 = vpop.permute.xlu0 %811
      %815 = vset.pattern.permute.xlu0 0
      %816 = vperm.xlu0 %815, %v662
      %v817 = vpop.permute.xlu0 %816
      %820 = vset.pattern.permute.xlu0 0
      %821 = vperm.xlu0 %820, %v663
      %v822 = vpop.permute.xlu0 %821
      %825 = vset.pattern.permute.xlu0 0
      %826 = vperm.xlu0 %825, %v664
      %v827 = vpop.permute.xlu0 %826
      %830 = vset.pattern.permute.xlu0 0
      %831 = vperm.xlu0 %830, %v665
      %v832 = vpop.permute.xlu0 %831
      %v834 = vadd.f32 %v736, %v767
      %v835 = vadd.f32 %v737, %v767
      %v836 = vadd.f32 %v738, %v772
      %v837 = vadd.f32 %v739, %v772
      %v838 = vadd.f32 %v740, %v777
      %v839 = vadd.f32 %v741, %v777
      %v840 = vadd.f32 %v742, %v782
      %v841 = vadd.f32 %v743, %v782
      %v842 = vadd.f32 %v744, %v787
      %v843 = vadd.f32 %v745, %v787
      %v844 = vadd.f32 %v746, %v792
      %v845 = vadd.f32 %v747, %v792
      %v846 = vadd.f32 %v748, %v797
      %v847 = vadd.f32 %v749, %v797
      %v848 = vadd.f32 %v750, %v802
      %v849 = vadd.f32 %v751, %v802
      %v850 = vadd.f32 %v752, %v807
      %v851 = vadd.f32 %v753, %v807
      %v852 = vadd.f32 %v754, %v812
      %v853 = vadd.f32 %v755, %v812
      %v854 = vadd.f32 %v756, %v817
      %v855 = vadd.f32 %v757, %v817
      %v856 = vadd.f32 %v758, %v822
      %v857 = vadd.f32 %v759, %v822
      %v858 = vadd.f32 %v760, %v827
      %v859 = vadd.f32 %v761, %v827
      %v860 = vadd.f32 %v762, %v832
      %v861 = vadd.f32 %v763, %v832
      %v862 = vld [vmem:[%s1] sm:$0xff]
      %v863 = vld [vmem:[%s1 + $0x8] sm:$0xff]
      %v864 = vld [vmem:[%s1 + $0x10] sm:$0xff]
      %v865 = vld [vmem:[%s1 + $0x18] sm:$0xff]
      %v866 = vld [vmem:[%s1 + $0x20] sm:$0xff]
      %v867 = vld [vmem:[%s1 + $0x28] sm:$0xff]
      %v868 = vld [vmem:[%s1 + $0x30] sm:$0xff]
      %v869 = vld [vmem:[%s1 + $0x38] sm:$0xff]
      %v870 = vld [vmem:[%s1 + $0x40] sm:$0xff]
      %v871 = vld [vmem:[%s1 + $0x48] sm:$0xff]
      %v872 = vld [vmem:[%s1 + $0x50] sm:$0xff]
      %v873 = vld [vmem:[%s1 + $0x58] sm:$0xff]
      %v874 = vld [vmem:[%s1 + $0x60] sm:$0xff]
      %v875 = vld [vmem:[%s1 + $0x68] sm:$0xff]
      %v876 = vld [vmem:[%s1 + $0x70] sm:$0xff]
      %v877 = vld [vmem:[%s1 + $0x78] sm:$0xff]
      %v878 = vld [vmem:[%s1 + $0x80] sm:$0xff]
      %v879 = vld [vmem:[%s1 + $0x88] sm:$0xff]
      %v880 = vld [vmem:[%s1 + $0x90] sm:$0xff]
      %v881 = vld [vmem:[%s1 + $0x98] sm:$0xff]
      %v882 = vld [vmem:[%s1 + $0xa0] sm:$0xff]
      %v883 = vld [vmem:[%s1 + $0xa8] sm:$0xff]
      %v884 = vld [vmem:[%s1 + $0xb0] sm:$0xff]
      %v885 = vld [vmem:[%s1 + $0xb8] sm:$0xff]
      %v886 = vld [vmem:[%s1 + $0xc0] sm:$0xff]
      %v887 = vld [vmem:[%s1 + $0xc8] sm:$0xff]
      %v888 = vld [vmem:[%s1 + $0xd0] sm:$0xff]
      %v889 = vld [vmem:[%s1 + $0xd8] sm:$0xff]
      %v890 = vadd.f32 %v834, %v862
      %v891 = vadd.f32 %v835, %v863
      %v892 = vadd.f32 %v836, %v864
      %v893 = vadd.f32 %v837, %v865
      %v894 = vadd.f32 %v838, %v866
      %v895 = vadd.f32 %v839, %v867
      %v896 = vadd.f32 %v840, %v868
      %v897 = vadd.f32 %v841, %v869
      %v898 = vadd.f32 %v842, %v870
      %v899 = vadd.f32 %v843, %v871
      %v900 = vadd.f32 %v844, %v872
      %v901 = vadd.f32 %v845, %v873
      %v902 = vadd.f32 %v846, %v874
      %v903 = vadd.f32 %v847, %v875
      %v904 = vadd.f32 %v848, %v876
      %v905 = vadd.f32 %v849, %v877
      %v906 = vadd.f32 %v850, %v878
      %v907 = vadd.f32 %v851, %v879
      %v908 = vadd.f32 %v852, %v880
      %v909 = vadd.f32 %v853, %v881
      %v910 = vadd.f32 %v854, %v882
      %v911 = vadd.f32 %v855, %v883
      %v912 = vadd.f32 %v856, %v884
      %v913 = vadd.f32 %v857, %v885
      %v914 = vadd.f32 %v858, %v886
      %v915 = vadd.f32 %v859, %v887
      %v916 = vadd.f32 %v860, %v888
      %v917 = vadd.f32 %v861, %v889
      %v918 = vld [vmem:[%s307] sm:$0xf]
      %v919 = vld [vmem:[%s307 + $0x4] sm:$0xf]
      %v920 = vld [vmem:[%s307 + $0x8] sm:$0xf]
      %v921 = vld [vmem:[%s307 + $0xc] sm:$0xf]
      %v922 = vld [vmem:[%s307 + $0x10] sm:$0xf]
      %v923 = vld [vmem:[%s307 + $0x14] sm:$0xf]
      %v924 = vld [vmem:[%s307 + $0x18] sm:$0xf]
      %v925 = vld [vmem:[%s307 + $0x1c] sm:$0xf]
      %v926 = vld [vmem:[%s307 + $0x20] sm:$0xf]
      %v927 = vld [vmem:[%s307 + $0x24] sm:$0xf]
      %v928 = vld [vmem:[%s307 + $0x28] sm:$0xf]
      %v929 = vld [vmem:[%s307 + $0x2c] sm:$0xf]
      %v930 = vld [vmem:[%s307 + $0x30] sm:$0xf]
      %v931 = vld [vmem:[%s307 + $0x34] sm:$0xf]
      %v932 = vld [vmem:[%s307 + $0x38] sm:$0xf]
      %v933 = vld [vmem:[%s307 + $0x3c] sm:$0xf]
      %v934 = vld [vmem:[%s307 + $0x40] sm:$0xf]
      %v935 = vld [vmem:[%s307 + $0x44] sm:$0xf]
      %v936 = vld [vmem:[%s307 + $0x48] sm:$0xf]
      %v937 = vld [vmem:[%s307 + $0x4c] sm:$0xf]
      %v938 = vld [vmem:[%s307 + $0x50] sm:$0xf]
      %v939 = vld [vmem:[%s307 + $0x54] sm:$0xf]
      %v940 = vld [vmem:[%s307 + $0x58] sm:$0xf]
      %v941 = vld [vmem:[%s307 + $0x5c] sm:$0xf]
      %v942 = vld [vmem:[%s307 + $0x60] sm:$0xf]
      %v943 = vld [vmem:[%s307 + $0x64] sm:$0xf]
      %v944 = vld [vmem:[%s307 + $0x68] sm:$0xf]
      %v945 = vld [vmem:[%s307 + $0x6c] sm:$0xf]
      %v946 = vld [vmem:[%s307 + $0x70] sm:$0xf]
      %v947 = vld [vmem:[%s307 + $0x74] sm:$0xf]
      %v948 = vld [vmem:[%s307 + $0x78] sm:$0xf]
      %v949 = vld [vmem:[%s307 + $0x7c] sm:$0xf]
      %v950 = vld [vmem:[%s307 + $0x80] sm:$0xf]
      %v951 = vld [vmem:[%s307 + $0x84] sm:$0xf]
      %v952 = vld [vmem:[%s307 + $0x88] sm:$0xf]
      %v953 = vld [vmem:[%s307 + $0x8c] sm:$0xf]
      %v954 = vld [vmem:[%s307 + $0x90] sm:$0xf]
      %v955 = vld [vmem:[%s307 + $0x94] sm:$0xf]
      %v956 = vld [vmem:[%s307 + $0x98] sm:$0xf]
      %v957 = vld [vmem:[%s307 + $0x9c] sm:$0xf]
      %v958 = vld [vmem:[%s307 + $0xa0] sm:$0xf]
      %v959 = vld [vmem:[%s307 + $0xa4] sm:$0xf]
      %v960 = vpack.c.bf16 %v892, %v890
      %v961 = vpack.c.bf16 %v893, %v891
      %v962 = vpack.c.bf16 %v896, %v894
      %v963 = vpack.c.bf16 %v897, %v895
      %v964 = vpack.c.bf16 %v900, %v898
      %v965 = vpack.c.bf16 %v901, %v899
      %v966 = vpack.c.bf16 %v904, %v902
      %v967 = vpack.c.bf16 %v905, %v903
      %v968 = vpack.c.bf16 %v908, %v906
      %v969 = vpack.c.bf16 %v909, %v907
      %v970 = vpack.c.bf16 %v912, %v910
      %v971 = vpack.c.bf16 %v913, %v911
      %v972 = vpack.c.bf16 %v916, %v914
      %v973 = vpack.c.bf16 %v917, %v915
      %v1016 = vunpack.c.l.b16 %v918
      %v1017 = vunpack.c.l.b16 %v919
      %v1018 = vunpack.c.l.b16 %v920
      %v1019 = vunpack.c.l.b16 %v921
      %v1020 = vunpack.c.l.b16 %v922
      %v1021 = vunpack.c.l.b16 %v923
      %v1022 = vunpack.c.l.b16 %v924
      %v1023 = vunpack.c.l.b16 %v925
      %v1024 = vunpack.c.l.b16 %v926
      %v1025 = vunpack.c.l.b16 %v927
      %v1026 = vunpack.c.l.b16 %v928
      %v1027 = vunpack.c.l.b16 %v929
      %v1028 = vunpack.c.l.b16 %v930
      %v1029 = vunpack.c.l.b16 %v931
      %v1030 = vunpack.c.l.b16 %v932
      %v1031 = vunpack.c.l.b16 %v933
      %v1032 = vunpack.c.l.b16 %v934
      %v1033 = vunpack.c.l.b16 %v935
      %v1034 = vunpack.c.l.b16 %v936
      %v1035 = vunpack.c.l.b16 %v937
      %v1036 = vunpack.c.l.b16 %v938
      %v1037 = vunpack.c.l.b16 %v939
      %v1038 = vunpack.c.l.b16 %v940
      %v1039 = vunpack.c.l.b16 %v941
      %v1040 = vunpack.c.l.b16 %v942
      %v1041 = vunpack.c.l.b16 %v943
      %v1042 = vunpack.c.l.b16 %v944
      %v1043 = vunpack.c.l.b16 %v945
      %v1044 = vunpack.c.l.b16 %v946
      %v1045 = vunpack.c.l.b16 %v947
      %v1046 = vunpack.c.l.b16 %v948
      %v1047 = vunpack.c.l.b16 %v949
      %v1048 = vunpack.c.l.b16 %v950
      %v1049 = vunpack.c.l.b16 %v951
      %v1050 = vunpack.c.l.b16 %v952
      %v1051 = vunpack.c.l.b16 %v953
      %v1052 = vunpack.c.l.b16 %v954
      %v1053 = vunpack.c.l.b16 %v955
      %v1054 = vunpack.c.l.b16 %v956
      %v1055 = vunpack.c.l.b16 %v957
      %v1056 = vunpack.c.l.b16 %v958
      %v1057 = vunpack.c.l.b16 %v959
      %v1058 = vpack.c.b16 %v1017, %v1016
      %v1059 = vpack.c.b16 %v1019, %v1018
      %v1060 = vpack.c.b16 %v1021, %v1020
      %v1061 = vpack.c.b16 %v1023, %v1022
      %v1062 = vpack.c.b16 %v1025, %v1024
      %v1063 = vpack.c.b16 %v1027, %v1026
      %v1064 = vpack.c.b16 %v1029, %v1028
      %v1065 = vpack.c.b16 %v1031, %v1030
      %v1066 = vpack.c.b16 %v1033, %v1032
      %v1067 = vpack.c.b16 %v1035, %v1034
      %v1068 = vpack.c.b16 %v1037, %v1036
      %v1069 = vpack.c.b16 %v1039, %v1038
      %v1070 = vpack.c.b16 %v1041, %v1040
      %v1071 = vpack.c.b16 %v1043, %v1042
      %v1072 = vpack.c.b16 %v1045, %v1044
      %v1073 = vpack.c.b16 %v1047, %v1046
      %v1074 = vpack.c.b16 %v1049, %v1048
      %v1075 = vpack.c.b16 %v1051, %v1050
      %v1076 = vpack.c.b16 %v1053, %v1052
      %v1077 = vpack.c.b16 %v1055, %v1054
      %v1078 = vpack.c.b16 %v1057, %v1056
      %vm1079 = vcmask 916480
      %v1081 = vsel %vm1079, %v1058, 0
      %v1084 = vsel %vm1079, %v1059, 0
      %v1087 = vsel %vm1079, %v1060, 0
      %v1090 = vsel %vm1079, %v1061, 0
      %v1093 = vsel %vm1079, %v1062, 0
      %v1096 = vsel %vm1079, %v1063, 0
      %v1099 = vsel %vm1079, %v1064, 0
      %v1102 = vsel %vm1079, %v1065, 0
      %v1105 = vsel %vm1079, %v1066, 0
      %v1108 = vsel %vm1079, %v1067, 0
      %v1111 = vsel %vm1079, %v1068, 0
      %v1114 = vsel %vm1079, %v1069, 0
      %v1117 = vsel %vm1079, %v1070, 0
      %v1120 = vsel %vm1079, %v1071, 0
      %v1123 = vsel %vm1079, %v1072, 0
      %v1126 = vsel %vm1079, %v1073, 0
      %v1129 = vsel %vm1079, %v1074, 0
      %v1132 = vsel %vm1079, %v1075, 0
      %v1135 = vsel %vm1079, %v1076, 0
      %v1138 = vsel %vm1079, %v1077, 0
      %v1141 = vsel %vm1079, %v1078, 0
      %1143 = vmatprep.subr.bf16.mxu0 %v961
      %1144 = vmatpush1.bf16.msra.mxu0 %v960
      %1145 = vmatprep.subr.bf16.mxu0 %v963
      %1146 = vmatpush1.bf16.msra.mxu0 %v962
      %1147 = vmatprep.subr.bf16.mxu0 %v965
      %1148 = vmatpush1.bf16.msra.mxu0 %v964
      %1149 = vmatprep.subr.bf16.mxu0 %v967
      %1150 = vmatpush1.bf16.msra.mxu0 %v966
      %1151 = vmatprep.subr.bf16.mxu0 %v969
      %1152 = vmatpush1.bf16.msra.mxu0 %v968
      %1153 = vmatprep.subr.bf16.mxu0 %v971
      %1154 = vmatpush1.bf16.msra.mxu0 %v970
      %1155 = vmatprep.subr.bf16.mxu0 %v973
      %1156 = vmatpush1.bf16.msra.mxu0 %v972
      %1157 = vmatprep.subr.bf16.mxu0 0
      %1158 = vmatpush1.bf16.msra.mxu0 0
      %1159 = vmatprep.subr.bf16.mxu0 0
      %1160 = vmatpush1.bf16.msra.mxu0 0
      %1161 = vmatprep.subr.bf16.mxu0 0
      %1162 = vmatpush1.bf16.msra.mxu0 0
      %1163 = vmatprep.subr.bf16.mxu0 0
      %1164 = vmatpush1.bf16.msra.mxu0 0
      %1165 = vmatprep.subr.bf16.mxu0 0
      %1166 = vmatpush1.bf16.msra.mxu0 0
      %1167 = vmatprep.subr.bf16.mxu0 0
      %1168 = vmatpush1.bf16.msra.mxu0 0
      %1169 = vmatprep.subr.bf16.mxu0 0
      %1170 = vmatpush1.bf16.msra.mxu0 0
      %1171 = vmatprep.subr.bf16.mxu0 0
      %1172 = vmatpush1.bf16.msra.mxu0 0
      %1173 = vmatprep.subr.bf16.mxu0 0
      %1174 = vmatpush1.bf16.msra.mxu0 0
      %1175 = vmatprep.mubr.bf16.mxu0 0
      %1176 = vmatmul.mubr.bf16.gmra.mrb[0].mxu0 %v1081
      %v1177 = vpop.f32.mrb[0].mxu0
      %v1178 = vadd.f32 0.0, %v1177
      %v1179 = vpop.f32.mrb[0].mxu0
      %v1180 = vadd.f32 0.0, %v1179
      %v1181 = vpop.f32.mrb[0].mxu0
      %v1182 = vadd.f32 0.0, %v1181
      %v1183 = vpop.f32.mrb[0].mxu0
      %v1184 = vadd.f32 0.0, %v1183
      %1185 = vmatprep.mubr.bf16.mxu0 0
      %1186 = vmatmul.mubr.bf16.gmra.mrb[0].mxu0 %v1084
      %v1187 = vpop.f32.mrb[0].mxu0
      %v1188 = vadd.f32 0.0, %v1187
      %v1189 = vpop.f32.mrb[0].mxu0
      %v1190 = vadd.f32 0.0, %v1189
      %v1191 = vpop.f32.mrb[0].mxu0
      %v1192 = vadd.f32 0.0, %v1191
      %v1193 = vpop.f32.mrb[0].mxu0
      %v1194 = vadd.f32 0.0, %v1193
      %1195 = vmatprep.mubr.bf16.mxu0 0
      %1196 = vmatmul.mubr.bf16.gmra.mrb[0].mxu0 %v1087
      %v1197 = vpop.f32.mrb[0].mxu0
      %v1198 = vadd.f32 0.0, %v1197
      %v1199 = vpop.f32.mrb[0].mxu0
      %v1200 = vadd.f32 0.0, %v1199
      %v1201 = vpop.f32.mrb[0].mxu0
      %v1202 = vadd.f32 0.0, %v1201
      %v1203 = vpop.f32.mrb[0].mxu0
      %v1204 = vadd.f32 0.0, %v1203
      %1205 = vmatprep.mubr.bf16.mxu0 0
      %1206 = vmatmul.mubr.bf16.gmra.mrb[0].mxu0 %v1090
      %v1207 = vpop.f32.mrb[0].mxu0
      %v1208 = vadd.f32 0.0, %v1207
      %v1209 = vpop.f32.mrb[0].mxu0
      %v1210 = vadd.f32 0.0, %v1209
      %v1211 = vpop.f32.mrb[0].mxu0
      %v1212 = vadd.f32 0.0, %v1211
      %v1213 = vpop.f32.mrb[0].mxu0
      %v1214 = vadd.f32 0.0, %v1213
      %1215 = vmatprep.mubr.bf16.mxu0 0
      %1216 = vmatmul.mubr.bf16.gmra.mrb[0].mxu0 %v1093
      %v1217 = vpop.f32.mrb[0].mxu0
      %v1218 = vadd.f32 0.0, %v1217
      %v1219 = vpop.f32.mrb[0].mxu0
      %v1220 = vadd.f32 0.0, %v1219
      %v1221 = vpop.f32.mrb[0].mxu0
      %v1222 = vadd.f32 0.0, %v1221
      %v1223 = vpop.f32.mrb[0].mxu0
      %v1224 = vadd.f32 0.0, %v1223
      %1225 = vmatprep.mubr.bf16.mxu0 0
      %1226 = vmatmul.mubr.bf16.gmra.mrb[0].mxu0 %v1096
      %v1227 = vpop.f32.mrb[0].mxu0
      %v1228 = vadd.f32 0.0, %v1227
      %v1229 = vpop.f32.mrb[0].mxu0
      %v1230 = vadd.f32 0.0, %v1229
      %v1231 = vpop.f32.mrb[0].mxu0
      %v1232 = vadd.f32 0.0, %v1231
      %v1233 = vpop.f32.mrb[0].mxu0
      %v1234 = vadd.f32 0.0, %v1233
      %1235 = vmatprep.mubr.bf16.mxu0 0
      %1236 = vmatmul.mubr.bf16.gmra.mrb[0].mxu0 %v1099
      %v1237 = vpop.f32.mrb[0].mxu0
      %v1238 = vadd.f32 0.0, %v1237
      %v1239 = vpop.f32.mrb[0].mxu0
      %v1240 = vadd.f32 0.0, %v1239
      %v1241 = vpop.f32.mrb[0].mxu0
      %v1242 = vadd.f32 0.0, %v1241
      %v1243 = vpop.f32.mrb[0].mxu0
      %v1244 = vadd.f32 0.0, %v1243
      %1245 = vmatprep.mubr.bf16.mxu0 0
      %1246 = vmatmul.mubr.bf16.gmra.mrb[0].mxu0 %v1102
      %v1247 = vpop.f32.mrb[0].mxu0
      %v1248 = vadd.f32 0.0, %v1247
      %v1249 = vpop.f32.mrb[0].mxu0
      %v1250 = vadd.f32 0.0, %v1249
      %v1251 = vpop.f32.mrb[0].mxu0
      %v1252 = vadd.f32 0.0, %v1251
      %v1253 = vpop.f32.mrb[0].mxu0
      %v1254 = vadd.f32 0.0, %v1253
      %1255 = vmatprep.mubr.bf16.mxu0 0
      %1256 = vmatmul.mubr.bf16.gmra.mrb[0].mxu0 %v1105
      %v1257 = vpop.f32.mrb[0].mxu0
      %v1258 = vadd.f32 0.0, %v1257
      %v1259 = vpop.f32.mrb[0].mxu0
      %v1260 = vadd.f32 0.0, %v1259
      %v1261 = vpop.f32.mrb[0].mxu0
      %v1262 = vadd.f32 0.0, %v1261
      %v1263 = vpop.f32.mrb[0].mxu0
      %v1264 = vadd.f32 0.0, %v1263
      %1265 = vmatprep.mubr.bf16.mxu0 0
      %1266 = vmatmul.mubr.bf16.gmra.mrb[0].mxu0 %v1108
      %v1267 = vpop.f32.mrb[0].mxu0
      %v1268 = vadd.f32 0.0, %v1267
      %v1269 = vpop.f32.mrb[0].mxu0
      %v1270 = vadd.f32 0.0, %v1269
      %v1271 = vpop.f32.mrb[0].mxu0
      %v1272 = vadd.f32 0.0, %v1271
      %v1273 = vpop.f32.mrb[0].mxu0
      %v1274 = vadd.f32 0.0, %v1273
      %1275 = vmatprep.mubr.bf16.mxu0 0
      %1276 = vmatmul.mubr.bf16.gmra.mrb[0].mxu0 %v1111
      %v1277 = vpop.f32.mrb[0].mxu0
      %v1278 = vadd.f32 0.0, %v1277
      %v1279 = vpop.f32.mrb[0].mxu0
      %v1280 = vadd.f32 0.0, %v1279
      %v1281 = vpop.f32.mrb[0].mxu0
      %v1282 = vadd.f32 0.0, %v1281
      %v1283 = vpop.f32.mrb[0].mxu0
      %v1284 = vadd.f32 0.0, %v1283
      %1285 = vmatprep.mubr.bf16.mxu0 0
      %1286 = vmatmul.mubr.bf16.gmra.mrb[0].mxu0 %v1114
      %v1287 = vpop.f32.mrb[0].mxu0
      %v1288 = vadd.f32 0.0, %v1287
      %v1289 = vpop.f32.mrb[0].mxu0
      %v1290 = vadd.f32 0.0, %v1289
      %v1291 = vpop.f32.mrb[0].mxu0
      %v1292 = vadd.f32 0.0, %v1291
      %v1293 = vpop.f32.mrb[0].mxu0
      %v1294 = vadd.f32 0.0, %v1293
      %1295 = vmatprep.mubr.bf16.mxu0 0
      %1296 = vmatmul.mubr.bf16.gmra.mrb[0].mxu0 %v1117
      %v1297 = vpop.f32.mrb[0].mxu0
      %v1298 = vadd.f32 0.0, %v1297
      %v1299 = vpop.f32.mrb[0].mxu0
      %v1300 = vadd.f32 0.0, %v1299
      %v1301 = vpop.f32.mrb[0].mxu0
      %v1302 = vadd.f32 0.0, %v1301
      %v1303 = vpop.f32.mrb[0].mxu0
      %v1304 = vadd.f32 0.0, %v1303
      %1305 = vmatprep.mubr.bf16.mxu0 0
      %1306 = vmatmul.mubr.bf16.gmra.mrb[0].mxu0 %v1120
      %v1307 = vpop.f32.mrb[0].mxu0
      %v1308 = vadd.f32 0.0, %v1307
      %v1309 = vpop.f32.mrb[0].mxu0
      %v1310 = vadd.f32 0.0, %v1309
      %v1311 = vpop.f32.mrb[0].mxu0
      %v1312 = vadd.f32 0.0, %v1311
      %v1313 = vpop.f32.mrb[0].mxu0
      %v1314 = vadd.f32 0.0, %v1313
      %1315 = vmatprep.mubr.bf16.mxu0 0
      %1316 = vmatmul.mubr.bf16.gmra.mrb[0].mxu0 %v1123
      %v1317 = vpop.f32.mrb[0].mxu0
      %v1318 = vadd.f32 0.0, %v1317
      %v1319 = vpop.f32.mrb[0].mxu0
      %v1320 = vadd.f32 0.0, %v1319
      %v1321 = vpop.f32.mrb[0].mxu0
      %v1322 = vadd.f32 0.0, %v1321
      %v1323 = vpop.f32.mrb[0].mxu0
      %v1324 = vadd.f32 0.0, %v1323
      %1325 = vmatprep.mubr.bf16.mxu0 0
      %1326 = vmatmul.mubr.bf16.gmra.mrb[0].mxu0 %v1126
      %v1327 = vpop.f32.mrb[0].mxu0
      %v1328 = vadd.f32 0.0, %v1327
      %v1329 = vpop.f32.mrb[0].mxu0
      %v1330 = vadd.f32 0.0, %v1329
      %v1331 = vpop.f32.mrb[0].mxu0
      %v1332 = vadd.f32 0.0, %v1331
      %v1333 = vpop.f32.mrb[0].mxu0
      %v1334 = vadd.f32 0.0, %v1333
      %1335 = vmatprep.mubr.bf16.mxu0 0
      %1336 = vmatmul.mubr.bf16.gmra.mrb[0].mxu0 %v1129
      %v1337 = vpop.f32.mrb[0].mxu0
      %v1338 = vadd.f32 0.0, %v1337
      %v1339 = vpop.f32.mrb[0].mxu0
      %v1340 = vadd.f32 0.0, %v1339
      %v1341 = vpop.f32.mrb[0].mxu0
      %v1342 = vadd.f32 0.0, %v1341
      %v1343 = vpop.f32.mrb[0].mxu0
      %v1344 = vadd.f32 0.0, %v1343
      %1345 = vmatprep.mubr.bf16.mxu0 0
      %1346 = vmatmul.mubr.bf16.gmra.mrb[0].mxu0 %v1132
      %v1347 = vpop.f32.mrb[0].mxu0
      %v1348 = vadd.f32 0.0, %v1347
      %v1349 = vpop.f32.mrb[0].mxu0
      %v1350 = vadd.f32 0.0, %v1349
      %v1351 = vpop.f32.mrb[0].mxu0
      %v1352 = vadd.f32 0.0, %v1351
      %v1353 = vpop.f32.mrb[0].mxu0
      %v1354 = vadd.f32 0.0, %v1353
      %1355 = vmatprep.mubr.bf16.mxu0 0
      %1356 = vmatmul.mubr.bf16.gmra.mrb[0].mxu0 %v1135
      %v1357 = vpop.f32.mrb[0].mxu0
      %v1358 = vadd.f32 0.0, %v1357
      %v1359 = vpop.f32.mrb[0].mxu0
      %v1360 = vadd.f32 0.0, %v1359
      %v1361 = vpop.f32.mrb[0].mxu0
      %v1362 = vadd.f32 0.0, %v1361
      %v1363 = vpop.f32.mrb[0].mxu0
      %v1364 = vadd.f32 0.0, %v1363
      %1365 = vmatprep.mubr.bf16.mxu0 0
      %1366 = vmatmul.mubr.bf16.gmra.mrb[0].mxu0 %v1138
      %v1367 = vpop.f32.mrb[0].mxu0
      %v1368 = vadd.f32 0.0, %v1367
      %v1369 = vpop.f32.mrb[0].mxu0
      %v1370 = vadd.f32 0.0, %v1369
      %v1371 = vpop.f32.mrb[0].mxu0
      %v1372 = vadd.f32 0.0, %v1371
      %v1373 = vpop.f32.mrb[0].mxu0
      %v1374 = vadd.f32 0.0, %v1373
      %1375 = vmatprep.mubr.bf16.mxu0 0
      %1376 = vmatmul.mubr.bf16.gmra.mrb[0].mxu0 %v1141
      %v1377 = vpop.f32.mrb[0].mxu0
      %v1378 = vadd.f32 0.0, %v1377
      %v1379 = vpop.f32.mrb[0].mxu0
      %v1380 = vadd.f32 0.0, %v1379
      %v1381 = vpop.f32.mrb[0].mxu0
      %v1382 = vadd.f32 0.0, %v1381
      %v1383 = vpop.f32.mrb[0].mxu0
      %v1384 = vadd.f32 0.0, %v1383
      %1385 = vdwg.mxu0
      %v1386 = vsel %vm357, %v1180, 0.0
      %v1387 = vadd.f32 %v1178, %v1386
      %1388 = vadd.xlane.f32.xlu0 %v1387
      %v1389 = vpop.xlane.xlu0 %1388
      %v1390 = vsel %vm357, %v1184, 0.0
      %v1391 = vadd.f32 %v1182, %v1390
      %1392 = vadd.xlane.f32.xlu0 %v1391
      %v1393 = vpop.xlane.xlu0 %1392
      %v1394 = vsel %vm357, %v1190, 0.0
      %v1395 = vadd.f32 %v1188, %v1394
      %1396 = vadd.xlane.f32.xlu0 %v1395
      %v1397 = vpop.xlane.xlu0 %1396
      %v1398 = vsel %vm357, %v1194, 0.0
      %v1399 = vadd.f32 %v1192, %v1398
      %1400 = vadd.xlane.f32.xlu0 %v1399
      %v1401 = vpop.xlane.xlu0 %1400
      %v1402 = vsel %vm357, %v1200, 0.0
      %v1403 = vadd.f32 %v1198, %v1402
      %1404 = vadd.xlane.f32.xlu0 %v1403
      %v1405 = vpop.xlane.xlu0 %1404
      %v1406 = vsel %vm357, %v1204, 0.0
      %v1407 = vadd.f32 %v1202, %v1406
      %1408 = vadd.xlane.f32.xlu0 %v1407
      %v1409 = vpop.xlane.xlu0 %1408
      %v1410 = vsel %vm357, %v1210, 0.0
      %v1411 = vadd.f32 %v1208, %v1410
      %1412 = vadd.xlane.f32.xlu0 %v1411
      %v1413 = vpop.xlane.xlu0 %1412
      %v1414 = vsel %vm357, %v1214, 0.0
      %v1415 = vadd.f32 %v1212, %v1414
      %1416 = vadd.xlane.f32.xlu0 %v1415
      %v1417 = vpop.xlane.xlu0 %1416
      %v1418 = vsel %vm357, %v1220, 0.0
      %v1419 = vadd.f32 %v1218, %v1418
      %1420 = vadd.xlane.f32.xlu0 %v1419
      %v1421 = vpop.xlane.xlu0 %1420
      %v1422 = vsel %vm357, %v1224, 0.0
      %v1423 = vadd.f32 %v1222, %v1422
      %1424 = vadd.xlane.f32.xlu0 %v1423
      %v1425 = vpop.xlane.xlu0 %1424
      %v1426 = vsel %vm357, %v1230, 0.0
      %v1427 = vadd.f32 %v1228, %v1426
      %1428 = vadd.xlane.f32.xlu0 %v1427
      %v1429 = vpop.xlane.xlu0 %1428
      %v1430 = vsel %vm357, %v1234, 0.0
      %v1431 = vadd.f32 %v1232, %v1430
      %1432 = vadd.xlane.f32.xlu0 %v1431
      %v1433 = vpop.xlane.xlu0 %1432
      %v1434 = vsel %vm357, %v1240, 0.0
      %v1435 = vadd.f32 %v1238, %v1434
      %1436 = vadd.xlane.f32.xlu0 %v1435
      %v1437 = vpop.xlane.xlu0 %1436
      %v1438 = vsel %vm357, %v1244, 0.0
      %v1439 = vadd.f32 %v1242, %v1438
      %1440 = vadd.xlane.f32.xlu0 %v1439
      %v1441 = vpop.xlane.xlu0 %1440
      %v1442 = vsel %vm357, %v1250, 0.0
      %v1443 = vadd.f32 %v1248, %v1442
      %1444 = vadd.xlane.f32.xlu0 %v1443
      %v1445 = vpop.xlane.xlu0 %1444
      %v1446 = vsel %vm357, %v1254, 0.0
      %v1447 = vadd.f32 %v1252, %v1446
      %1448 = vadd.xlane.f32.xlu0 %v1447
      %v1449 = vpop.xlane.xlu0 %1448
      %v1450 = vsel %vm357, %v1260, 0.0
      %v1451 = vadd.f32 %v1258, %v1450
      %1452 = vadd.xlane.f32.xlu0 %v1451
      %v1453 = vpop.xlane.xlu0 %1452
      %v1454 = vsel %vm357, %v1264, 0.0
      %v1455 = vadd.f32 %v1262, %v1454
      %1456 = vadd.xlane.f32.xlu0 %v1455
      %v1457 = vpop.xlane.xlu0 %1456
      %v1458 = vsel %vm357, %v1270, 0.0
      %v1459 = vadd.f32 %v1268, %v1458
      %1460 = vadd.xlane.f32.xlu0 %v1459
      %v1461 = vpop.xlane.xlu0 %1460
      %v1462 = vsel %vm357, %v1274, 0.0
      %v1463 = vadd.f32 %v1272, %v1462
      %1464 = vadd.xlane.f32.xlu0 %v1463
      %v1465 = vpop.xlane.xlu0 %1464
      %v1466 = vsel %vm357, %v1280, 0.0
      %v1467 = vadd.f32 %v1278, %v1466
      %1468 = vadd.xlane.f32.xlu0 %v1467
      %v1469 = vpop.xlane.xlu0 %1468
      %v1470 = vsel %vm357, %v1284, 0.0
      %v1471 = vadd.f32 %v1282, %v1470
      %1472 = vadd.xlane.f32.xlu0 %v1471
      %v1473 = vpop.xlane.xlu0 %1472
      %v1474 = vsel %vm357, %v1290, 0.0
      %v1475 = vadd.f32 %v1288, %v1474
      %1476 = vadd.xlane.f32.xlu0 %v1475
      %v1477 = vpop.xlane.xlu0 %1476
      %v1478 = vsel %vm357, %v1294, 0.0
      %v1479 = vadd.f32 %v1292, %v1478
      %1480 = vadd.xlane.f32.xlu0 %v1479
      %v1481 = vpop.xlane.xlu0 %1480
      %v1482 = vsel %vm357, %v1300, 0.0
      %v1483 = vadd.f32 %v1298, %v1482
      %1484 = vadd.xlane.f32.xlu0 %v1483
      %v1485 = vpop.xlane.xlu0 %1484
      %v1486 = vsel %vm357, %v1304, 0.0
      %v1487 = vadd.f32 %v1302, %v1486
      %1488 = vadd.xlane.f32.xlu0 %v1487
      %v1489 = vpop.xlane.xlu0 %1488
      %v1490 = vsel %vm357, %v1310, 0.0
      %v1491 = vadd.f32 %v1308, %v1490
      %1492 = vadd.xlane.f32.xlu0 %v1491
      %v1493 = vpop.xlane.xlu0 %1492
      %v1494 = vsel %vm357, %v1314, 0.0
      %v1495 = vadd.f32 %v1312, %v1494
      %1496 = vadd.xlane.f32.xlu0 %v1495
      %v1497 = vpop.xlane.xlu0 %1496
      %v1498 = vsel %vm357, %v1320, 0.0
      %v1499 = vadd.f32 %v1318, %v1498
      %1500 = vadd.xlane.f32.xlu0 %v1499
      %v1501 = vpop.xlane.xlu0 %1500
      %v1502 = vsel %vm357, %v1324, 0.0
      %v1503 = vadd.f32 %v1322, %v1502
      %1504 = vadd.xlane.f32.xlu0 %v1503
      %v1505 = vpop.xlane.xlu0 %1504
      %v1506 = vsel %vm357, %v1330, 0.0
      %v1507 = vadd.f32 %v1328, %v1506
      %1508 = vadd.xlane.f32.xlu0 %v1507
      %v1509 = vpop.xlane.xlu0 %1508
      %v1510 = vsel %vm357, %v1334, 0.0
      %v1511 = vadd.f32 %v1332, %v1510
      %1512 = vadd.xlane.f32.xlu0 %v1511
      %v1513 = vpop.xlane.xlu0 %1512
      %v1514 = vsel %vm357, %v1340, 0.0
      %v1515 = vadd.f32 %v1338, %v1514
      %1516 = vadd.xlane.f32.xlu0 %v1515
      %v1517 = vpop.xlane.xlu0 %1516
      %v1518 = vsel %vm357, %v1344, 0.0
      %v1519 = vadd.f32 %v1342, %v1518
      %1520 = vadd.xlane.f32.xlu0 %v1519
      %v1521 = vpop.xlane.xlu0 %1520
      %v1522 = vsel %vm357, %v1350, 0.0
      %v1523 = vadd.f32 %v1348, %v1522
      %1524 = vadd.xlane.f32.xlu0 %v1523
      %v1525 = vpop.xlane.xlu0 %1524
      %v1526 = vsel %vm357, %v1354, 0.0
      %v1527 = vadd.f32 %v1352, %v1526
      %1528 = vadd.xlane.f32.xlu0 %v1527
      %v1529 = vpop.xlane.xlu0 %1528
      %v1530 = vsel %vm357, %v1360, 0.0
      %v1531 = vadd.f32 %v1358, %v1530
      %1532 = vadd.xlane.f32.xlu0 %v1531
      %v1533 = vpop.xlane.xlu0 %1532
      %v1534 = vsel %vm357, %v1364, 0.0
      %v1535 = vadd.f32 %v1362, %v1534
      %1536 = vadd.xlane.f32.xlu0 %v1535
      %v1537 = vpop.xlane.xlu0 %1536
      %v1538 = vsel %vm357, %v1370, 0.0
      %v1539 = vadd.f32 %v1368, %v1538
      %1540 = vadd.xlane.f32.xlu0 %v1539
      %v1541 = vpop.xlane.xlu0 %1540
      %v1542 = vsel %vm357, %v1374, 0.0
      %v1543 = vadd.f32 %v1372, %v1542
      %1544 = vadd.xlane.f32.xlu0 %v1543
      %v1545 = vpop.xlane.xlu0 %1544
      %v1546 = vsel %vm357, %v1380, 0.0
      %v1547 = vadd.f32 %v1378, %v1546
      %1548 = vadd.xlane.f32.xlu0 %v1547
      %v1549 = vpop.xlane.xlu0 %1548
      %v1550 = vsel %vm357, %v1384, 0.0
      %v1551 = vadd.f32 %v1382, %v1550
      %1552 = vadd.xlane.f32.xlu0 %v1551
      %v1553 = vpop.xlane.xlu0 %1552
      %v1554 = vmul.f32 %v1389, 0.0051020407
      %v1555 = vmul.f32 %v1393, 0.0051020407
      %v1556 = vmul.f32 %v1397, 0.0051020407
      %v1557 = vmul.f32 %v1401, 0.0051020407
      %v1558 = vmul.f32 %v1405, 0.0051020407
      %v1559 = vmul.f32 %v1409, 0.0051020407
      %v1560 = vmul.f32 %v1413, 0.0051020407
      %v1561 = vmul.f32 %v1417, 0.0051020407
      %v1562 = vmul.f32 %v1421, 0.0051020407
      %v1563 = vmul.f32 %v1425, 0.0051020407
      %v1564 = vmul.f32 %v1429, 0.0051020407
      %v1565 = vmul.f32 %v1433, 0.0051020407
      %v1566 = vmul.f32 %v1437, 0.0051020407
      %v1567 = vmul.f32 %v1441, 0.0051020407
      %v1568 = vmul.f32 %v1445, 0.0051020407
      %v1569 = vmul.f32 %v1449, 0.0051020407
      %v1570 = vmul.f32 %v1453, 0.0051020407
      %v1571 = vmul.f32 %v1457, 0.0051020407
      %v1572 = vmul.f32 %v1461, 0.0051020407
      %v1573 = vmul.f32 %v1465, 0.0051020407
      %v1574 = vmul.f32 %v1469, 0.0051020407
      %v1575 = vmul.f32 %v1473, 0.0051020407
      %v1576 = vmul.f32 %v1477, 0.0051020407
      %v1577 = vmul.f32 %v1481, 0.0051020407
      %v1578 = vmul.f32 %v1485, 0.0051020407
      %v1579 = vmul.f32 %v1489, 0.0051020407
      %v1580 = vmul.f32 %v1493, 0.0051020407
      %v1581 = vmul.f32 %v1497, 0.0051020407
      %v1582 = vmul.f32 %v1501, 0.0051020407
      %v1583 = vmul.f32 %v1505, 0.0051020407
      %v1584 = vmul.f32 %v1509, 0.0051020407
      %v1585 = vmul.f32 %v1513, 0.0051020407
      %v1586 = vmul.f32 %v1517, 0.0051020407
      %v1587 = vmul.f32 %v1521, 0.0051020407
      %v1588 = vmul.f32 %v1525, 0.0051020407
      %v1589 = vmul.f32 %v1529, 0.0051020407
      %v1590 = vmul.f32 %v1533, 0.0051020407
      %v1591 = vmul.f32 %v1537, 0.0051020407
      %v1592 = vmul.f32 %v1541, 0.0051020407
      %v1593 = vmul.f32 %v1545, 0.0051020407
      %v1594 = vmul.f32 %v1549, 0.0051020407
      %v1595 = vmul.f32 %v1553, 0.0051020407
      %v1596 = vmul.f32 %v1178, %v1178
      %v1597 = vmul.f32 %v1180, %v1180
      %v1598 = vmul.f32 %v1182, %v1182
      %v1599 = vmul.f32 %v1184, %v1184
      %v1600 = vmul.f32 %v1188, %v1188
      %v1601 = vmul.f32 %v1190, %v1190
      %v1602 = vmul.f32 %v1192, %v1192
      %v1603 = vmul.f32 %v1194, %v1194
      %v1604 = vmul.f32 %v1198, %v1198
      %v1605 = vmul.f32 %v1200, %v1200
      %v1606 = vmul.f32 %v1202, %v1202
      %v1607 = vmul.f32 %v1204, %v1204
      %v1608 = vmul.f32 %v1208, %v1208
      %v1609 = vmul.f32 %v1210, %v1210
      %v1610 = vmul.f32 %v1212, %v1212
      %v1611 = vmul.f32 %v1214, %v1214
      %v1612 = vmul.f32 %v1218, %v1218
      %v1613 = vmul.f32 %v1220, %v1220
      %v1614 = vmul.f32 %v1222, %v1222
      %v1615 = vmul.f32 %v1224, %v1224
      %v1616 = vmul.f32 %v1228, %v1228
      %v1617 = vmul.f32 %v1230, %v1230
      %v1618 = vmul.f32 %v1232, %v1232
      %v1619 = vmul.f32 %v1234, %v1234
      %v1620 = vmul.f32 %v1238, %v1238
      %v1621 = vmul.f32 %v1240, %v1240
      %v1622 = vmul.f32 %v1242, %v1242
      %v1623 = vmul.f32 %v1244, %v1244
      %v1624 = vmul.f32 %v1248, %v1248
      %v1625 = vmul.f32 %v1250, %v1250
      %v1626 = vmul.f32 %v1252, %v1252
      %v1627 = vmul.f32 %v1254, %v1254
      %v1628 = vmul.f32 %v1258, %v1258
      %v1629 = vmul.f32 %v1260, %v1260
      %v1630 = vmul.f32 %v1262, %v1262
      %v1631 = vmul.f32 %v1264, %v1264
      %v1632 = vmul.f32 %v1268, %v1268
      %v1633 = vmul.f32 %v1270, %v1270
      %v1634 = vmul.f32 %v1272, %v1272
      %v1635 = vmul.f32 %v1274, %v1274
      %v1636 = vmul.f32 %v1278, %v1278
      %v1637 = vmul.f32 %v1280, %v1280
      %v1638 = vmul.f32 %v1282, %v1282
      %v1639 = vmul.f32 %v1284, %v1284
      %v1640 = vmul.f32 %v1288, %v1288
      %v1641 = vmul.f32 %v1290, %v1290
      %v1642 = vmul.f32 %v1292, %v1292
      %v1643 = vmul.f32 %v1294, %v1294
      %v1644 = vmul.f32 %v1298, %v1298
      %v1645 = vmul.f32 %v1300, %v1300
      %v1646 = vmul.f32 %v1302, %v1302
      %v1647 = vmul.f32 %v1304, %v1304
      %v1648 = vmul.f32 %v1308, %v1308
      %v1649 = vmul.f32 %v1310, %v1310
      %v1650 = vmul.f32 %v1312, %v1312
      %v1651 = vmul.f32 %v1314, %v1314
      %v1652 = vmul.f32 %v1318, %v1318
      %v1653 = vmul.f32 %v1320, %v1320
      %v1654 = vmul.f32 %v1322, %v1322
      %v1655 = vmul.f32 %v1324, %v1324
      %v1656 = vmul.f32 %v1328, %v1328
      %v1657 = vmul.f32 %v1330, %v1330
      %v1658 = vmul.f32 %v1332, %v1332
      %v1659 = vmul.f32 %v1334, %v1334
      %v1660 = vmul.f32 %v1338, %v1338
      %v1661 = vmul.f32 %v1340, %v1340
      %v1662 = vmul.f32 %v1342, %v1342
      %v1663 = vmul.f32 %v1344, %v1344
      %v1664 = vmul.f32 %v1348, %v1348
      %v1665 = vmul.f32 %v1350, %v1350
      %v1666 = vmul.f32 %v1352, %v1352
      %v1667 = vmul.f32 %v1354, %v1354
      %v1668 = vmul.f32 %v1358, %v1358
      %v1669 = vmul.f32 %v1360, %v1360
      %v1670 = vmul.f32 %v1362, %v1362
      %v1671 = vmul.f32 %v1364, %v1364
      %v1672 = vmul.f32 %v1368, %v1368
      %v1673 = vmul.f32 %v1370, %v1370
      %v1674 = vmul.f32 %v1372, %v1372
      %v1675 = vmul.f32 %v1374, %v1374
      %v1676 = vmul.f32 %v1378, %v1378
      %v1677 = vmul.f32 %v1380, %v1380
      %v1678 = vmul.f32 %v1382, %v1382
      %v1679 = vmul.f32 %v1384, %v1384
      %v1680 = vsel %vm357, %v1597, 0.0
      %v1681 = vadd.f32 %v1596, %v1680
      %1682 = vadd.xlane.f32.xlu0 %v1681
      %v1683 = vpop.xlane.xlu0 %1682
      %v1684 = vsel %vm357, %v1599, 0.0
      %v1685 = vadd.f32 %v1598, %v1684
      %1686 = vadd.xlane.f32.xlu0 %v1685
      %v1687 = vpop.xlane.xlu0 %1686
      %v1688 = vsel %vm357, %v1601, 0.0
      %v1689 = vadd.f32 %v1600, %v1688
      %1690 = vadd.xlane.f32.xlu0 %v1689
      %v1691 = vpop.xlane.xlu0 %1690
      %v1692 = vsel %vm357, %v1603, 0.0
      %v1693 = vadd.f32 %v1602, %v1692
      %1694 = vadd.xlane.f32.xlu0 %v1693
      %v1695 = vpop.xlane.xlu0 %1694
      %v1696 = vsel %vm357, %v1605, 0.0
      %v1697 = vadd.f32 %v1604, %v1696
      %1698 = vadd.xlane.f32.xlu0 %v1697
      %v1699 = vpop.xlane.xlu0 %1698
      %v1700 = vsel %vm357, %v1607, 0.0
      %v1701 = vadd.f32 %v1606, %v1700
      %1702 = vadd.xlane.f32.xlu0 %v1701
      %v1703 = vpop.xlane.xlu0 %1702
      %v1704 = vsel %vm357, %v1609, 0.0
      %v1705 = vadd.f32 %v1608, %v1704
      %1706 = vadd.xlane.f32.xlu0 %v1705
      %v1707 = vpop.xlane.xlu0 %1706
      %v1708 = vsel %vm357, %v1611, 0.0
      %v1709 = vadd.f32 %v1610, %v1708
      %1710 = vadd.xlane.f32.xlu0 %v1709
      %v1711 = vpop.xlane.xlu0 %1710
      %v1712 = vsel %vm357, %v1613, 0.0
      %v1713 = vadd.f32 %v1612, %v1712
      %1714 = vadd.xlane.f32.xlu0 %v1713
      %v1715 = vpop.xlane.xlu0 %1714
      %v1716 = vsel %vm357, %v1615, 0.0
      %v1717 = vadd.f32 %v1614, %v1716
      %1718 = vadd.xlane.f32.xlu0 %v1717
      %v1719 = vpop.xlane.xlu0 %1718
      %v1720 = vsel %vm357, %v1617, 0.0
      %v1721 = vadd.f32 %v1616, %v1720
      %1722 = vadd.xlane.f32.xlu0 %v1721
      %v1723 = vpop.xlane.xlu0 %1722
      %v1724 = vsel %vm357, %v1619, 0.0
      %v1725 = vadd.f32 %v1618, %v1724
      %1726 = vadd.xlane.f32.xlu0 %v1725
      %v1727 = vpop.xlane.xlu0 %1726
      %v1728 = vsel %vm357, %v1621, 0.0
      %v1729 = vadd.f32 %v1620, %v1728
      %1730 = vadd.xlane.f32.xlu0 %v1729
      %v1731 = vpop.xlane.xlu0 %1730
      %v1732 = vsel %vm357, %v1623, 0.0
      %v1733 = vadd.f32 %v1622, %v1732
      %1734 = vadd.xlane.f32.xlu0 %v1733
      %v1735 = vpop.xlane.xlu0 %1734
      %v1736 = vsel %vm357, %v1625, 0.0
      %v1737 = vadd.f32 %v1624, %v1736
      %1738 = vadd.xlane.f32.xlu0 %v1737
      %v1739 = vpop.xlane.xlu0 %1738
      %v1740 = vsel %vm357, %v1627, 0.0
      %v1741 = vadd.f32 %v1626, %v1740
      %1742 = vadd.xlane.f32.xlu0 %v1741
      %v1743 = vpop.xlane.xlu0 %1742
      %v1744 = vsel %vm357, %v1629, 0.0
      %v1745 = vadd.f32 %v1628, %v1744
      %1746 = vadd.xlane.f32.xlu0 %v1745
      %v1747 = vpop.xlane.xlu0 %1746
      %v1748 = vsel %vm357, %v1631, 0.0
      %v1749 = vadd.f32 %v1630, %v1748
      %1750 = vadd.xlane.f32.xlu0 %v1749
      %v1751 = vpop.xlane.xlu0 %1750
      %v1752 = vsel %vm357, %v1633, 0.0
      %v1753 = vadd.f32 %v1632, %v1752
      %1754 = vadd.xlane.f32.xlu0 %v1753
      %v1755 = vpop.xlane.xlu0 %1754
      %v1756 = vsel %vm357, %v1635, 0.0
      %v1757 = vadd.f32 %v1634, %v1756
      %1758 = vadd.xlane.f32.xlu0 %v1757
      %v1759 = vpop.xlane.xlu0 %1758
      %v1760 = vsel %vm357, %v1637, 0.0
      %v1761 = vadd.f32 %v1636, %v1760
      %1762 = vadd.xlane.f32.xlu0 %v1761
      %v1763 = vpop.xlane.xlu0 %1762
      %v1764 = vsel %vm357, %v1639, 0.0
      %v1765 = vadd.f32 %v1638, %v1764
      %1766 = vadd.xlane.f32.xlu0 %v1765
      %v1767 = vpop.xlane.xlu0 %1766
      %v1768 = vsel %vm357, %v1641, 0.0
      %v1769 = vadd.f32 %v1640, %v1768
      %1770 = vadd.xlane.f32.xlu0 %v1769
      %v1771 = vpop.xlane.xlu0 %1770
      %v1772 = vsel %vm357, %v1643, 0.0
      %v1773 = vadd.f32 %v1642, %v1772
      %1774 = vadd.xlane.f32.xlu0 %v1773
      %v1775 = vpop.xlane.xlu0 %1774
      %v1776 = vsel %vm357, %v1645, 0.0
      %v1777 = vadd.f32 %v1644, %v1776
      %1778 = vadd.xlane.f32.xlu0 %v1777
      %v1779 = vpop.xlane.xlu0 %1778
      %v1780 = vsel %vm357, %v1647, 0.0
      %v1781 = vadd.f32 %v1646, %v1780
      %1782 = vadd.xlane.f32.xlu0 %v1781
      %v1783 = vpop.xlane.xlu0 %1782
      %v1784 = vsel %vm357, %v1649, 0.0
      %v1785 = vadd.f32 %v1648, %v1784
      %1786 = vadd.xlane.f32.xlu0 %v1785
      %v1787 = vpop.xlane.xlu0 %1786
      %v1788 = vsel %vm357, %v1651, 0.0
      %v1789 = vadd.f32 %v1650, %v1788
      %1790 = vadd.xlane.f32.xlu0 %v1789
      %v1791 = vpop.xlane.xlu0 %1790
      %v1792 = vsel %vm357, %v1653, 0.0
      %v1793 = vadd.f32 %v1652, %v1792
      %1794 = vadd.xlane.f32.xlu0 %v1793
      %v1795 = vpop.xlane.xlu0 %1794
      %v1796 = vsel %vm357, %v1655, 0.0
      %v1797 = vadd.f32 %v1654, %v1796
      %1798 = vadd.xlane.f32.xlu0 %v1797
      %v1799 = vpop.xlane.xlu0 %1798
      %v1800 = vsel %vm357, %v1657, 0.0
      %v1801 = vadd.f32 %v1656, %v1800
      %1802 = vadd.xlane.f32.xlu0 %v1801
      %v1803 = vpop.xlane.xlu0 %1802
      %v1804 = vsel %vm357, %v1659, 0.0
      %v1805 = vadd.f32 %v1658, %v1804
      %1806 = vadd.xlane.f32.xlu0 %v1805
      %v1807 = vpop.xlane.xlu0 %1806
      %v1808 = vsel %vm357, %v1661, 0.0
      %v1809 = vadd.f32 %v1660, %v1808
      %1810 = vadd.xlane.f32.xlu0 %v1809
      %v1811 = vpop.xlane.xlu0 %1810
      %v1812 = vsel %vm357, %v1663, 0.0
      %v1813 = vadd.f32 %v1662, %v1812
      %1814 = vadd.xlane.f32.xlu0 %v1813
      %v1815 = vpop.xlane.xlu0 %1814
      %v1816 = vsel %vm357, %v1665, 0.0
      %v1817 = vadd.f32 %v1664, %v1816
      %1818 = vadd.xlane.f32.xlu0 %v1817
      %v1819 = vpop.xlane.xlu0 %1818
      %v1820 = vsel %vm357, %v1667, 0.0
      %v1821 = vadd.f32 %v1666, %v1820
      %1822 = vadd.xlane.f32.xlu0 %v1821
      %v1823 = vpop.xlane.xlu0 %1822
      %v1824 = vsel %vm357, %v1669, 0.0
      %v1825 = vadd.f32 %v1668, %v1824
      %1826 = vadd.xlane.f32.xlu0 %v1825
      %v1827 = vpop.xlane.xlu0 %1826
      %v1828 = vsel %vm357, %v1671, 0.0
      %v1829 = vadd.f32 %v1670, %v1828
      %1830 = vadd.xlane.f32.xlu0 %v1829
      %v1831 = vpop.xlane.xlu0 %1830
      %v1832 = vsel %vm357, %v1673, 0.0
      %v1833 = vadd.f32 %v1672, %v1832
      %1834 = vadd.xlane.f32.xlu0 %v1833
      %v1835 = vpop.xlane.xlu0 %1834
      %v1836 = vsel %vm357, %v1675, 0.0
      %v1837 = vadd.f32 %v1674, %v1836
      %1838 = vadd.xlane.f32.xlu0 %v1837
      %v1839 = vpop.xlane.xlu0 %1838
      %v1840 = vsel %vm357, %v1677, 0.0
      %v1841 = vadd.f32 %v1676, %v1840
      %1842 = vadd.xlane.f32.xlu0 %v1841
      %v1843 = vpop.xlane.xlu0 %1842
      %v1844 = vsel %vm357, %v1679, 0.0
      %v1845 = vadd.f32 %v1678, %v1844
      %1846 = vadd.xlane.f32.xlu0 %v1845
      %v1847 = vpop.xlane.xlu0 %1846
      %v1848 = vmul.f32 %v1683, 0.0051020407
      %v1849 = vmul.f32 %v1687, 0.0051020407
      %v1850 = vmul.f32 %v1691, 0.0051020407
      %v1851 = vmul.f32 %v1695, 0.0051020407
      %v1852 = vmul.f32 %v1699, 0.0051020407
      %v1853 = vmul.f32 %v1703, 0.0051020407
      %v1854 = vmul.f32 %v1707, 0.0051020407
      %v1855 = vmul.f32 %v1711, 0.0051020407
      %v1856 = vmul.f32 %v1715, 0.0051020407
      %v1857 = vmul.f32 %v1719, 0.0051020407
      %v1858 = vmul.f32 %v1723, 0.0051020407
      %v1859 = vmul.f32 %v1727, 0.0051020407
      %v1860 = vmul.f32 %v1731, 0.0051020407
      %v1861 = vmul.f32 %v1735, 0.0051020407
      %v1862 = vmul.f32 %v1739, 0.0051020407
      %v1863 = vmul.f32 %v1743, 0.0051020407
      %v1864 = vmul.f32 %v1747, 0.0051020407
      %v1865 = vmul.f32 %v1751, 0.0051020407
      %v1866 = vmul.f32 %v1755, 0.0051020407
      %v1867 = vmul.f32 %v1759, 0.0051020407
      %v1868 = vmul.f32 %v1763, 0.0051020407
      %v1869 = vmul.f32 %v1767, 0.0051020407
      %v1870 = vmul.f32 %v1771, 0.0051020407
      %v1871 = vmul.f32 %v1775, 0.0051020407
      %v1872 = vmul.f32 %v1779, 0.0051020407
      %v1873 = vmul.f32 %v1783, 0.0051020407
      %v1874 = vmul.f32 %v1787, 0.0051020407
      %v1875 = vmul.f32 %v1791, 0.0051020407
      %v1876 = vmul.f32 %v1795, 0.0051020407
      %v1877 = vmul.f32 %v1799, 0.0051020407
      %v1878 = vmul.f32 %v1803, 0.0051020407
      %v1879 = vmul.f32 %v1807, 0.0051020407
      %v1880 = vmul.f32 %v1811, 0.0051020407
      %v1881 = vmul.f32 %v1815, 0.0051020407
      %v1882 = vmul.f32 %v1819, 0.0051020407
      %v1883 = vmul.f32 %v1823, 0.0051020407
      %v1884 = vmul.f32 %v1827, 0.0051020407
      %v1885 = vmul.f32 %v1831, 0.0051020407
      %v1886 = vmul.f32 %v1835, 0.0051020407
      %v1887 = vmul.f32 %v1839, 0.0051020407
      %v1888 = vmul.f32 %v1843, 0.0051020407
      %v1889 = vmul.f32 %v1847, 0.0051020407
      %v1890 = vmul.f32 %v1554, %v1554
      %v1891 = vmul.f32 %v1555, %v1555
      %v1892 = vmul.f32 %v1556, %v1556
      %v1893 = vmul.f32 %v1557, %v1557
      %v1894 = vmul.f32 %v1558, %v1558
      %v1895 = vmul.f32 %v1559, %v1559
      %v1896 = vmul.f32 %v1560, %v1560
      %v1897 = vmul.f32 %v1561, %v1561
      %v1898 = vmul.f32 %v1562, %v1562
      %v1899 = vmul.f32 %v1563, %v1563
      %v1900 = vmul.f32 %v1564, %v1564
      %v1901 = vmul.f32 %v1565, %v1565
      %v1902 = vmul.f32 %v1566, %v1566
      %v1903 = vmul.f32 %v1567, %v1567
      %v1904 = vmul.f32 %v1568, %v1568
      %v1905 = vmul.f32 %v1569, %v1569
      %v1906 = vmul.f32 %v1570, %v1570
      %v1907 = vmul.f32 %v1571, %v1571
      %v1908 = vmul.f32 %v1572, %v1572
      %v1909 = vmul.f32 %v1573, %v1573
      %v1910 = vmul.f32 %v1574, %v1574
      %v1911 = vmul.f32 %v1575, %v1575
      %v1912 = vmul.f32 %v1576, %v1576
      %v1913 = vmul.f32 %v1577, %v1577
      %v1914 = vmul.f32 %v1578, %v1578
      %v1915 = vmul.f32 %v1579, %v1579
      %v1916 = vmul.f32 %v1580, %v1580
      %v1917 = vmul.f32 %v1581, %v1581
      %v1918 = vmul.f32 %v1582, %v1582
      %v1919 = vmul.f32 %v1583, %v1583
      %v1920 = vmul.f32 %v1584, %v1584
      %v1921 = vmul.f32 %v1585, %v1585
      %v1922 = vmul.f32 %v1586, %v1586
      %v1923 = vmul.f32 %v1587, %v1587
      %v1924 = vmul.f32 %v1588, %v1588
      %v1925 = vmul.f32 %v1589, %v1589
      %v1926 = vmul.f32 %v1590, %v1590
      %v1927 = vmul.f32 %v1591, %v1591
      %v1928 = vmul.f32 %v1592, %v1592
      %v1929 = vmul.f32 %v1593, %v1593
      %v1930 = vmul.f32 %v1594, %v1594
      %v1931 = vmul.f32 %v1595, %v1595
      %v1932 = vsub.f32 %v1848, %v1890
      %v1933 = vsub.f32 %v1849, %v1891
      %v1934 = vsub.f32 %v1850, %v1892
      %v1935 = vsub.f32 %v1851, %v1893
      %v1936 = vsub.f32 %v1852, %v1894
      %v1937 = vsub.f32 %v1853, %v1895
      %v1938 = vsub.f32 %v1854, %v1896
      %v1939 = vsub.f32 %v1855, %v1897
      %v1940 = vsub.f32 %v1856, %v1898
      %v1941 = vsub.f32 %v1857, %v1899
      %v1942 = vsub.f32 %v1858, %v1900
      %v1943 = vsub.f32 %v1859, %v1901
      %v1944 = vsub.f32 %v1860, %v1902
      %v1945 = vsub.f32 %v1861, %v1903
      %v1946 = vsub.f32 %v1862, %v1904
      %v1947 = vsub.f32 %v1863, %v1905
      %v1948 = vsub.f32 %v1864, %v1906
      %v1949 = vsub.f32 %v1865, %v1907
      %v1950 = vsub.f32 %v1866, %v1908
      %v1951 = vsub.f32 %v1867, %v1909
      %v1952 = vsub.f32 %v1868, %v1910
      %v1953 = vsub.f32 %v1869, %v1911
      %v1954 = vsub.f32 %v1870, %v1912
      %v1955 = vsub.f32 %v1871, %v1913
      %v1956 = vsub.f32 %v1872, %v1914
      %v1957 = vsub.f32 %v1873, %v1915
      %v1958 = vsub.f32 %v1874, %v1916
      %v1959 = vsub.f32 %v1875, %v1917
      %v1960 = vsub.f32 %v1876, %v1918
      %v1961 = vsub.f32 %v1877, %v1919
      %v1962 = vsub.f32 %v1878, %v1920
      %v1963 = vsub.f32 %v1879, %v1921
      %v1964 = vsub.f32 %v1880, %v1922
      %v1965 = vsub.f32 %v1881, %v1923
      %v1966 = vsub.f32 %v1882, %v1924
      %v1967 = vsub.f32 %v1883, %v1925
      %v1968 = vsub.f32 %v1884, %v1926
      %v1969 = vsub.f32 %v1885, %v1927
      %v1970 = vsub.f32 %v1886, %v1928
      %v1971 = vsub.f32 %v1887, %v1929
      %v1972 = vsub.f32 %v1888, %v1930
      %v1973 = vsub.f32 %v1889, %v1931
      %v1974 = vmax.f32 %v1932, 0.0
      %v1975 = vmax.f32 %v1933, 0.0
      %v1976 = vmax.f32 %v1934, 0.0
      %v1977 = vmax.f32 %v1935, 0.0
      %v1978 = vmax.f32 %v1936, 0.0
      %v1979 = vmax.f32 %v1937, 0.0
      %v1980 = vmax.f32 %v1938, 0.0
      %v1981 = vmax.f32 %v1939, 0.0
      %v1982 = vmax.f32 %v1940, 0.0
      %v1983 = vmax.f32 %v1941, 0.0
      %v1984 = vmax.f32 %v1942, 0.0
      %v1985 = vmax.f32 %v1943, 0.0
      %v1986 = vmax.f32 %v1944, 0.0
      %v1987 = vmax.f32 %v1945, 0.0
      %v1988 = vmax.f32 %v1946, 0.0
      %v1989 = vmax.f32 %v1947, 0.0
      %v1990 = vmax.f32 %v1948, 0.0
      %v1991 = vmax.f32 %v1949, 0.0
      %v1992 = vmax.f32 %v1950, 0.0
      %v1993 = vmax.f32 %v1951, 0.0
      %v1994 = vmax.f32 %v1952, 0.0
      %v1995 = vmax.f32 %v1953, 0.0
      %v1996 = vmax.f32 %v1954, 0.0
      %v1997 = vmax.f32 %v1955, 0.0
      %v1998 = vmax.f32 %v1956, 0.0
      %v1999 = vmax.f32 %v1957, 0.0
      %v2000 = vmax.f32 %v1958, 0.0
      %v2001 = vmax.f32 %v1959, 0.0
      %v2002 = vmax.f32 %v1960, 0.0
      %v2003 = vmax.f32 %v1961, 0.0
      %v2004 = vmax.f32 %v1962, 0.0
      %v2005 = vmax.f32 %v1963, 0.0
      %v2006 = vmax.f32 %v1964, 0.0
      %v2007 = vmax.f32 %v1965, 0.0
      %v2008 = vmax.f32 %v1966, 0.0
      %v2009 = vmax.f32 %v1967, 0.0
      %v2010 = vmax.f32 %v1968, 0.0
      %v2011 = vmax.f32 %v1969, 0.0
      %v2012 = vmax.f32 %v1970, 0.0
      %v2013 = vmax.f32 %v1971, 0.0
      %v2014 = vmax.f32 %v1972, 0.0
      %v2015 = vmax.f32 %v1973, 0.0
      %v2016 = vld [vmem:[%s313] sm:$0xff]
      %v2017 = vld [vmem:[%s313 + $0x8] sm:$0xff]
      %v2018 = vld [vmem:[%s313 + $0x10] sm:$0xff]
      %v2019 = vld [vmem:[%s313 + $0x18] sm:$0xff]
      %v2020 = vld [vmem:[%s313 + $0x20] sm:$0xff]
      %v2021 = vld [vmem:[%s313 + $0x28] sm:$0xff]
      %v2022 = vld [vmem:[%s313 + $0x30] sm:$0xff]
      %v2023 = vld [vmem:[%s313 + $0x38] sm:$0xff]
      %v2024 = vld [vmem:[%s313 + $0x40] sm:$0xff]
      %v2025 = vld [vmem:[%s313 + $0x48] sm:$0xff]
      %v2026 = vld [vmem:[%s313 + $0x50] sm:$0xff]
      %v2027 = vld [vmem:[%s313 + $0x58] sm:$0xff]
      %v2028 = vld [vmem:[%s313 + $0x60] sm:$0xff]
      %v2029 = vld [vmem:[%s313 + $0x68] sm:$0xff]
      %v2030 = vld [vmem:[%s313 + $0x70] sm:$0xff]
      %v2031 = vld [vmem:[%s313 + $0x78] sm:$0xff]
      %v2032 = vld [vmem:[%s313 + $0x80] sm:$0xff]
      %v2033 = vld [vmem:[%s313 + $0x88] sm:$0xff]
      %v2034 = vld [vmem:[%s313 + $0x90] sm:$0xff]
      %v2035 = vld [vmem:[%s313 + $0x98] sm:$0xff]
      %v2036 = vld [vmem:[%s313 + $0xa0] sm:$0xff]
      %v2037 = vld [vmem:[%s313 + $0xa8] sm:$0xff]
      %v2038 = vld [vmem:[%s313 + $0xb0] sm:$0xff]
      %v2039 = vld [vmem:[%s313 + $0xb8] sm:$0xff]
      %v2040 = vld [vmem:[%s313 + $0xc0] sm:$0xff]
      %v2041 = vld [vmem:[%s313 + $0xc8] sm:$0xff]
      %v2042 = vld [vmem:[%s313 + $0xd0] sm:$0xff]
      %v2043 = vld [vmem:[%s313 + $0xd8] sm:$0xff]
      %v2044 = vld [vmem:[%s313 + $0xe0] sm:$0xff]
      %v2045 = vld [vmem:[%s313 + $0xe8] sm:$0xff]
      %v2046 = vld [vmem:[%s313 + $0xf0] sm:$0xff]
      %v2047 = vld [vmem:[%s313 + $0xf8] sm:$0xff]
      %v2048 = vld [vmem:[%s313 + $0x100] sm:$0xff]
      %v2049 = vld [vmem:[%s313 + $0x108] sm:$0xff]
      %v2050 = vld [vmem:[%s313 + $0x110] sm:$0xff]
      %v2051 = vld [vmem:[%s313 + $0x118] sm:$0xff]
      %v2052 = vld [vmem:[%s313 + $0x120] sm:$0xff]
      %v2053 = vld [vmem:[%s313 + $0x128] sm:$0xff]
      %v2054 = vld [vmem:[%s313 + $0x130] sm:$0xff]
      %v2055 = vld [vmem:[%s313 + $0x138] sm:$0xff]
      %v2056 = vld [vmem:[%s313 + $0x140] sm:$0xff]
      %v2057 = vld [vmem:[%s313 + $0x148] sm:$0xff]
      %v2058 = vadd.f32 %v1974, 0.001
      %v2059 = vadd.f32 %v1975, 0.001
      %v2060 = vadd.f32 %v1976, 0.001
      %v2061 = vadd.f32 %v1977, 0.001
      %v2062 = vadd.f32 %v1978, 0.001
      %v2063 = vadd.f32 %v1979, 0.001
      %v2064 = vadd.f32 %v1980, 0.001
      %v2065 = vadd.f32 %v1981, 0.001
      %v2066 = vadd.f32 %v1982, 0.001
      %v2067 = vadd.f32 %v1983, 0.001
      %v2068 = vadd.f32 %v1984, 0.001
      %v2069 = vadd.f32 %v1985, 0.001
      %v2070 = vadd.f32 %v1986, 0.001
      %v2071 = vadd.f32 %v1987, 0.001
      %v2072 = vadd.f32 %v1988, 0.001
      %v2073 = vadd.f32 %v1989, 0.001
      %v2074 = vadd.f32 %v1990, 0.001
      %v2075 = vadd.f32 %v1991, 0.001
      %v2076 = vadd.f32 %v1992, 0.001
      %v2077 = vadd.f32 %v1993, 0.001
      %v2078 = vadd.f32 %v1994, 0.001
      %v2079 = vadd.f32 %v1995, 0.001
      %v2080 = vadd.f32 %v1996, 0.001
      %v2081 = vadd.f32 %v1997, 0.001
      %v2082 = vadd.f32 %v1998, 0.001
      %v2083 = vadd.f32 %v1999, 0.001
      %v2084 = vadd.f32 %v2000, 0.001
      %v2085 = vadd.f32 %v2001, 0.001
      %v2086 = vadd.f32 %v2002, 0.001
      %v2087 = vadd.f32 %v2003, 0.001
      %v2088 = vadd.f32 %v2004, 0.001
      %v2089 = vadd.f32 %v2005, 0.001
      %v2090 = vadd.f32 %v2006, 0.001
      %v2091 = vadd.f32 %v2007, 0.001
      %v2092 = vadd.f32 %v2008, 0.001
      %v2093 = vadd.f32 %v2009, 0.001
      %v2094 = vadd.f32 %v2010, 0.001
      %v2095 = vadd.f32 %v2011, 0.001
      %v2096 = vadd.f32 %v2012, 0.001
      %v2097 = vadd.f32 %v2013, 0.001
      %v2098 = vadd.f32 %v2014, 0.001
      %v2099 = vadd.f32 %v2015, 0.001
      %v2100 = vrsqrt.pop %v2058
      %v2101 = vrsqrt.pop %v2059
      %v2102 = vrsqrt.pop %v2060
      %v2103 = vrsqrt.pop %v2061
      %v2104 = vrsqrt.pop %v2062
      %v2105 = vrsqrt.pop %v2063
      %v2106 = vrsqrt.pop %v2064
      %v2107 = vrsqrt.pop %v2065
      %v2108 = vrsqrt.pop %v2066
      %v2109 = vrsqrt.pop %v2067
      %v2110 = vrsqrt.pop %v2068
      %v2111 = vrsqrt.pop %v2069
      %v2112 = vrsqrt.pop %v2070
      %v2113 = vrsqrt.pop %v2071
      %v2114 = vrsqrt.pop %v2072
      %v2115 = vrsqrt.pop %v2073
      %v2116 = vrsqrt.pop %v2074
      %v2117 = vrsqrt.pop %v2075
      %v2118 = vrsqrt.pop %v2076
      %v2119 = vrsqrt.pop %v2077
      %v2120 = vrsqrt.pop %v2078
      %v2121 = vrsqrt.pop %v2079
      %v2122 = vrsqrt.pop %v2080
      %v2123 = vrsqrt.pop %v2081
      %v2124 = vrsqrt.pop %v2082
      %v2125 = vrsqrt.pop %v2083
      %v2126 = vrsqrt.pop %v2084
      %v2127 = vrsqrt.pop %v2085
      %v2128 = vrsqrt.pop %v2086
      %v2129 = vrsqrt.pop %v2087
      %v2130 = vrsqrt.pop %v2088
      %v2131 = vrsqrt.pop %v2089
      %v2132 = vrsqrt.pop %v2090
      %v2133 = vrsqrt.pop %v2091
      %v2134 = vrsqrt.pop %v2092
      %v2135 = vrsqrt.pop %v2093
      %v2136 = vrsqrt.pop %v2094
      %v2137 = vrsqrt.pop %v2095
      %v2138 = vrsqrt.pop %v2096
      %v2139 = vrsqrt.pop %v2097
      %v2140 = vrsqrt.pop %v2098
      %v2141 = vrsqrt.pop %v2099
      %v2142 = vmul.f32 %v2016, %v2100
      %v2143 = vmul.f32 %v2017, %v2101
      %v2144 = vmul.f32 %v2018, %v2102
      %v2145 = vmul.f32 %v2019, %v2103
      %v2146 = vmul.f32 %v2020, %v2104
      %v2147 = vmul.f32 %v2021, %v2105
      %v2148 = vmul.f32 %v2022, %v2106
      %v2149 = vmul.f32 %v2023, %v2107
      %v2150 = vmul.f32 %v2024, %v2108
      %v2151 = vmul.f32 %v2025, %v2109
      %v2152 = vmul.f32 %v2026, %v2110
      %v2153 = vmul.f32 %v2027, %v2111
      %v2154 = vmul.f32 %v2028, %v2112
      %v2155 = vmul.f32 %v2029, %v2113
      %v2156 = vmul.f32 %v2030, %v2114
      %v2157 = vmul.f32 %v2031, %v2115
      %v2158 = vmul.f32 %v2032, %v2116
      %v2159 = vmul.f32 %v2033, %v2117
      %v2160 = vmul.f32 %v2034, %v2118
      %v2161 = vmul.f32 %v2035, %v2119
      %v2162 = vmul.f32 %v2036, %v2120
      %v2163 = vmul.f32 %v2037, %v2121
      %v2164 = vmul.f32 %v2038, %v2122
      %v2165 = vmul.f32 %v2039, %v2123
      %v2166 = vmul.f32 %v2040, %v2124
      %v2167 = vmul.f32 %v2041, %v2125
      %v2168 = vmul.f32 %v2042, %v2126
      %v2169 = vmul.f32 %v2043, %v2127
      %v2170 = vmul.f32 %v2044, %v2128
      %v2171 = vmul.f32 %v2045, %v2129
      %v2172 = vmul.f32 %v2046, %v2130
      %v2173 = vmul.f32 %v2047, %v2131
      %v2174 = vmul.f32 %v2048, %v2132
      %v2175 = vmul.f32 %v2049, %v2133
      %v2176 = vmul.f32 %v2050, %v2134
      %v2177 = vmul.f32 %v2051, %v2135
      %v2178 = vmul.f32 %v2052, %v2136
      %v2179 = vmul.f32 %v2053, %v2137
      %v2180 = vmul.f32 %v2054, %v2138
      %v2181 = vmul.f32 %v2055, %v2139
      %v2182 = vmul.f32 %v2056, %v2140
      %v2183 = vmul.f32 %v2057, %v2141
      %v2184 = vld [vmem:[%s319] sm:$0xff]
      %v2185 = vld [vmem:[%s319 + $0x8] sm:$0xff]
      %v2186 = vld [vmem:[%s319 + $0x10] sm:$0xff]
      %v2187 = vld [vmem:[%s319 + $0x18] sm:$0xff]
      %v2188 = vld [vmem:[%s319 + $0x20] sm:$0xff]
      %v2189 = vld [vmem:[%s319 + $0x28] sm:$0xff]
      %v2190 = vld [vmem:[%s319 + $0x30] sm:$0xff]
      %v2191 = vld [vmem:[%s319 + $0x38] sm:$0xff]
      %v2192 = vld [vmem:[%s319 + $0x40] sm:$0xff]
      %v2193 = vld [vmem:[%s319 + $0x48] sm:$0xff]
      %v2194 = vld [vmem:[%s319 + $0x50] sm:$0xff]
      %v2195 = vld [vmem:[%s319 + $0x58] sm:$0xff]
      %v2196 = vld [vmem:[%s319 + $0x60] sm:$0xff]
      %v2197 = vld [vmem:[%s319 + $0x68] sm:$0xff]
      %v2198 = vld [vmem:[%s319 + $0x70] sm:$0xff]
      %v2199 = vld [vmem:[%s319 + $0x78] sm:$0xff]
      %v2200 = vld [vmem:[%s319 + $0x80] sm:$0xff]
      %v2201 = vld [vmem:[%s319 + $0x88] sm:$0xff]
      %v2202 = vld [vmem:[%s319 + $0x90] sm:$0xff]
      %v2203 = vld [vmem:[%s319 + $0x98] sm:$0xff]
      %v2204 = vld [vmem:[%s319 + $0xa0] sm:$0xff]
      %v2205 = vld [vmem:[%s319 + $0xa8] sm:$0xff]
      %v2206 = vld [vmem:[%s319 + $0xb0] sm:$0xff]
      %v2207 = vld [vmem:[%s319 + $0xb8] sm:$0xff]
      %v2208 = vld [vmem:[%s319 + $0xc0] sm:$0xff]
      %v2209 = vld [vmem:[%s319 + $0xc8] sm:$0xff]
      %v2210 = vld [vmem:[%s319 + $0xd0] sm:$0xff]
      %v2211 = vld [vmem:[%s319 + $0xd8] sm:$0xff]
      %v2212 = vld [vmem:[%s319 + $0xe0] sm:$0xff]
      %v2213 = vld [vmem:[%s319 + $0xe8] sm:$0xff]
      %v2214 = vld [vmem:[%s319 + $0xf0] sm:$0xff]
      %v2215 = vld [vmem:[%s319 + $0xf8] sm:$0xff]
      %v2216 = vld [vmem:[%s319 + $0x100] sm:$0xff]
      %v2217 = vld [vmem:[%s319 + $0x108] sm:$0xff]
      %v2218 = vld [vmem:[%s319 + $0x110] sm:$0xff]
      %v2219 = vld [vmem:[%s319 + $0x118] sm:$0xff]
      %v2220 = vld [vmem:[%s319 + $0x120] sm:$0xff]
      %v2221 = vld [vmem:[%s319 + $0x128] sm:$0xff]
      %v2222 = vld [vmem:[%s319 + $0x130] sm:$0xff]
      %v2223 = vld [vmem:[%s319 + $0x138] sm:$0xff]
      %v2224 = vld [vmem:[%s319 + $0x140] sm:$0xff]
      %v2225 = vld [vmem:[%s319 + $0x148] sm:$0xff]
      %v2226 = vmul.f32 %v1554, %v2142
      %v2227 = vmul.f32 %v1555, %v2143
      %v2228 = vmul.f32 %v1556, %v2144
      %v2229 = vmul.f32 %v1557, %v2145
      %v2230 = vmul.f32 %v1558, %v2146
      %v2231 = vmul.f32 %v1559, %v2147
      %v2232 = vmul.f32 %v1560, %v2148
      %v2233 = vmul.f32 %v1561, %v2149
      %v2234 = vmul.f32 %v1562, %v2150
      %v2235 = vmul.f32 %v1563, %v2151
      %v2236 = vmul.f32 %v1564, %v2152
      %v2237 = vmul.f32 %v1565, %v2153
      %v2238 = vmul.f32 %v1566, %v2154
      %v2239 = vmul.f32 %v1567, %v2155
      %v2240 = vmul.f32 %v1568, %v2156
      %v2241 = vmul.f32 %v1569, %v2157
      %v2242 = vmul.f32 %v1570, %v2158
      %v2243 = vmul.f32 %v1571, %v2159
      %v2244 = vmul.f32 %v1572, %v2160
      %v2245 = vmul.f32 %v1573, %v2161
      %v2246 = vmul.f32 %v1574, %v2162
      %v2247 = vmul.f32 %v1575, %v2163
      %v2248 = vmul.f32 %v1576, %v2164
      %v2249 = vmul.f32 %v1577, %v2165
      %v2250 = vmul.f32 %v1578, %v2166
      %v2251 = vmul.f32 %v1579, %v2167
      %v2252 = vmul.f32 %v1580, %v2168
      %v2253 = vmul.f32 %v1581, %v2169
      %v2254 = vmul.f32 %v1582, %v2170
      %v2255 = vmul.f32 %v1583, %v2171
      %v2256 = vmul.f32 %v1584, %v2172
      %v2257 = vmul.f32 %v1585, %v2173
      %v2258 = vmul.f32 %v1586, %v2174
      %v2259 = vmul.f32 %v1587, %v2175
      %v2260 = vmul.f32 %v1588, %v2176
      %v2261 = vmul.f32 %v1589, %v2177
      %v2262 = vmul.f32 %v1590, %v2178
      %v2263 = vmul.f32 %v1591, %v2179
      %v2264 = vmul.f32 %v1592, %v2180
      %v2265 = vmul.f32 %v1593, %v2181
      %v2266 = vmul.f32 %v1594, %v2182
      %v2267 = vmul.f32 %v1595, %v2183
      %v2268 = vsub.f32 %v2184, %v2226
      %v2269 = vsub.f32 %v2185, %v2227
      %v2270 = vsub.f32 %v2186, %v2228
      %v2271 = vsub.f32 %v2187, %v2229
      %v2272 = vsub.f32 %v2188, %v2230
      %v2273 = vsub.f32 %v2189, %v2231
      %v2274 = vsub.f32 %v2190, %v2232
      %v2275 = vsub.f32 %v2191, %v2233
      %v2276 = vsub.f32 %v2192, %v2234
      %v2277 = vsub.f32 %v2193, %v2235
      %v2278 = vsub.f32 %v2194, %v2236
      %v2279 = vsub.f32 %v2195, %v2237
      %v2280 = vsub.f32 %v2196, %v2238
      %v2281 = vsub.f32 %v2197, %v2239
      %v2282 = vsub.f32 %v2198, %v2240
      %v2283 = vsub.f32 %v2199, %v2241
      %v2284 = vsub.f32 %v2200, %v2242
      %v2285 = vsub.f32 %v2201, %v2243
      %v2286 = vsub.f32 %v2202, %v2244
      %v2287 = vsub.f32 %v2203, %v2245
      %v2288 = vsub.f32 %v2204, %v2246
      %v2289 = vsub.f32 %v2205, %v2247
      %v2290 = vsub.f32 %v2206, %v2248
      %v2291 = vsub.f32 %v2207, %v2249
      %v2292 = vsub.f32 %v2208, %v2250
      %v2293 = vsub.f32 %v2209, %v2251
      %v2294 = vsub.f32 %v2210, %v2252
      %v2295 = vsub.f32 %v2211, %v2253
      %v2296 = vsub.f32 %v2212, %v2254
      %v2297 = vsub.f32 %v2213, %v2255
      %v2298 = vsub.f32 %v2214, %v2256
      %v2299 = vsub.f32 %v2215, %v2257
      %v2300 = vsub.f32 %v2216, %v2258
      %v2301 = vsub.f32 %v2217, %v2259
      %v2302 = vsub.f32 %v2218, %v2260
      %v2303 = vsub.f32 %v2219, %v2261
      %v2304 = vsub.f32 %v2220, %v2262
      %v2305 = vsub.f32 %v2221, %v2263
      %v2306 = vsub.f32 %v2222, %v2264
      %v2307 = vsub.f32 %v2223, %v2265
      %v2308 = vsub.f32 %v2224, %v2266
      %v2309 = vsub.f32 %v2225, %v2267
      %2311 = vset.pattern.permute.xlu0 0
      %2312 = vperm.xlu0 %2311, %v2142
      %v2313 = vpop.permute.xlu0 %2312
      %2316 = vset.pattern.permute.xlu0 0
      %2317 = vperm.xlu0 %2316, %v2143
      %v2318 = vpop.permute.xlu0 %2317
      %2321 = vset.pattern.permute.xlu0 0
      %2322 = vperm.xlu0 %2321, %v2144
      %v2323 = vpop.permute.xlu0 %2322
      %2326 = vset.pattern.permute.xlu0 0
      %2327 = vperm.xlu0 %2326, %v2145
      %v2328 = vpop.permute.xlu0 %2327
      %2331 = vset.pattern.permute.xlu0 0
      %2332 = vperm.xlu0 %2331, %v2146
      %v2333 = vpop.permute.xlu0 %2332
      %2336 = vset.pattern.permute.xlu0 0
      %2337 = vperm.xlu0 %2336, %v2147
      %v2338 = vpop.permute.xlu0 %2337
      %2341 = vset.pattern.permute.xlu0 0
      %2342 = vperm.xlu0 %2341, %v2148
      %v2343 = vpop.permute.xlu0 %2342
      %2346 = vset.pattern.permute.xlu0 0
      %2347 = vperm.xlu0 %2346, %v2149
      %v2348 = vpop.permute.xlu0 %2347
      %2351 = vset.pattern.permute.xlu0 0
      %2352 = vperm.xlu0 %2351, %v2150
      %v2353 = vpop.permute.xlu0 %2352
      %2356 = vset.pattern.permute.xlu0 0
      %2357 = vperm.xlu0 %2356, %v2151
      %v2358 = vpop.permute.xlu0 %2357
      %2361 = vset.pattern.permute.xlu0 0
      %2362 = vperm.xlu0 %2361, %v2152
      %v2363 = vpop.permute.xlu0 %2362
      %2366 = vset.pattern.permute.xlu0 0
      %2367 = vperm.xlu0 %2366, %v2153
      %v2368 = vpop.permute.xlu0 %2367
      %2371 = vset.pattern.permute.xlu0 0
      %2372 = vperm.xlu0 %2371, %v2154
      %v2373 = vpop.permute.xlu0 %2372
      %2376 = vset.pattern.permute.xlu0 0
      %2377 = vperm.xlu0 %2376, %v2155
      %v2378 = vpop.permute.xlu0 %2377
      %2381 = vset.pattern.permute.xlu0 0
      %2382 = vperm.xlu0 %2381, %v2156
      %v2383 = vpop.permute.xlu0 %2382
      %2386 = vset.pattern.permute.xlu0 0
      %2387 = vperm.xlu0 %2386, %v2157
      %v2388 = vpop.permute.xlu0 %2387
      %2391 = vset.pattern.permute.xlu0 0
      %2392 = vperm.xlu0 %2391, %v2158
      %v2393 = vpop.permute.xlu0 %2392
      %2396 = vset.pattern.permute.xlu0 0
      %2397 = vperm.xlu0 %2396, %v2159
      %v2398 = vpop.permute.xlu0 %2397
      %2401 = vset.pattern.permute.xlu0 0
      %2402 = vperm.xlu0 %2401, %v2160
      %v2403 = vpop.permute.xlu0 %2402
      %2406 = vset.pattern.permute.xlu0 0
      %2407 = vperm.xlu0 %2406, %v2161
      %v2408 = vpop.permute.xlu0 %2407
      %2411 = vset.pattern.permute.xlu0 0
      %2412 = vperm.xlu0 %2411, %v2162
      %v2413 = vpop.permute.xlu0 %2412
      %2416 = vset.pattern.permute.xlu0 0
      %2417 = vperm.xlu0 %2416, %v2163
      %v2418 = vpop.permute.xlu0 %2417
      %2421 = vset.pattern.permute.xlu0 0
      %2422 = vperm.xlu0 %2421, %v2164
      %v2423 = vpop.permute.xlu0 %2422
      %2426 = vset.pattern.permute.xlu0 0
      %2427 = vperm.xlu0 %2426, %v2165
      %v2428 = vpop.permute.xlu0 %2427
      %2431 = vset.pattern.permute.xlu0 0
      %2432 = vperm.xlu0 %2431, %v2166
      %v2433 = vpop.permute.xlu0 %2432
      %2436 = vset.pattern.permute.xlu0 0
      %2437 = vperm.xlu0 %2436, %v2167
      %v2438 = vpop.permute.xlu0 %2437
      %2441 = vset.pattern.permute.xlu0 0
      %2442 = vperm.xlu0 %2441, %v2168
      %v2443 = vpop.permute.xlu0 %2442
      %2446 = vset.pattern.permute.xlu0 0
      %2447 = vperm.xlu0 %2446, %v2169
      %v2448 = vpop.permute.xlu0 %2447
      %2451 = vset.pattern.permute.xlu0 0
      %2452 = vperm.xlu0 %2451, %v2170
      %v2453 = vpop.permute.xlu0 %2452
      %2456 = vset.pattern.permute.xlu0 0
      %2457 = vperm.xlu0 %2456, %v2171
      %v2458 = vpop.permute.xlu0 %2457
      %2461 = vset.pattern.permute.xlu0 0
      %2462 = vperm.xlu0 %2461, %v2172
      %v2463 = vpop.permute.xlu0 %2462
      %2466 = vset.pattern.permute.xlu0 0
      %2467 = vperm.xlu0 %2466, %v2173
      %v2468 = vpop.permute.xlu0 %2467
      %2471 = vset.pattern.permute.xlu0 0
      %2472 = vperm.xlu0 %2471, %v2174
      %v2473 = vpop.permute.xlu0 %2472
      %2476 = vset.pattern.permute.xlu0 0
      %2477 = vperm.xlu0 %2476, %v2175
      %v2478 = vpop.permute.xlu0 %2477
      %2481 = vset.pattern.permute.xlu0 0
      %2482 = vperm.xlu0 %2481, %v2176
      %v2483 = vpop.permute.xlu0 %2482
      %2486 = vset.pattern.permute.xlu0 0
      %2487 = vperm.xlu0 %2486, %v2177
      %v2488 = vpop.permute.xlu0 %2487
      %2491 = vset.pattern.permute.xlu0 0
      %2492 = vperm.xlu0 %2491, %v2178
      %v2493 = vpop.permute.xlu0 %2492
      %2496 = vset.pattern.permute.xlu0 0
      %2497 = vperm.xlu0 %2496, %v2179
      %v2498 = vpop.permute.xlu0 %2497
      %2501 = vset.pattern.permute.xlu0 0
      %2502 = vperm.xlu0 %2501, %v2180
      %v2503 = vpop.permute.xlu0 %2502
      %2506 = vset.pattern.permute.xlu0 0
      %2507 = vperm.xlu0 %2506, %v2181
      %v2508 = vpop.permute.xlu0 %2507
      %2511 = vset.pattern.permute.xlu0 0
      %2512 = vperm.xlu0 %2511, %v2182
      %v2513 = vpop.permute.xlu0 %2512
      %2516 = vset.pattern.permute.xlu0 0
      %2517 = vperm.xlu0 %2516, %v2183
      %v2518 = vpop.permute.xlu0 %2517
      %v2520 = vmul.f32 %v1178, %v2313
      %v2521 = vmul.f32 %v1180, %v2313
      %v2522 = vmul.f32 %v1182, %v2318
      %v2523 = vmul.f32 %v1184, %v2318
      %v2524 = vmul.f32 %v1188, %v2323
      %v2525 = vmul.f32 %v1190, %v2323
      %v2526 = vmul.f32 %v1192, %v2328
      %v2527 = vmul.f32 %v1194, %v2328
      %v2528 = vmul.f32 %v1198, %v2333
      %v2529 = vmul.f32 %v1200, %v2333
      %v2530 = vmul.f32 %v1202, %v2338
      %v2531 = vmul.f32 %v1204, %v2338
      %v2532 = vmul.f32 %v1208, %v2343
      %v2533 = vmul.f32 %v1210, %v2343
      %v2534 = vmul.f32 %v1212, %v2348
      %v2535 = vmul.f32 %v1214, %v2348
      %v2536 = vmul.f32 %v1218, %v2353
      %v2537 = vmul.f32 %v1220, %v2353
      %v2538 = vmul.f32 %v1222, %v2358
      %v2539 = vmul.f32 %v1224, %v2358
      %v2540 = vmul.f32 %v1228, %v2363
      %v2541 = vmul.f32 %v1230, %v2363
      %v2542 = vmul.f32 %v1232, %v2368
      %v2543 = vmul.f32 %v1234, %v2368
      %v2544 = vmul.f32 %v1238, %v2373
      %v2545 = vmul.f32 %v1240, %v2373
      %v2546 = vmul.f32 %v1242, %v2378
      %v2547 = vmul.f32 %v1244, %v2378
      %v2548 = vmul.f32 %v1248, %v2383
      %v2549 = vmul.f32 %v1250, %v2383
      %v2550 = vmul.f32 %v1252, %v2388
      %v2551 = vmul.f32 %v1254, %v2388
      %v2552 = vmul.f32 %v1258, %v2393
      %v2553 = vmul.f32 %v1260, %v2393
      %v2554 = vmul.f32 %v1262, %v2398
      %v2555 = vmul.f32 %v1264, %v2398
      %v2556 = vmul.f32 %v1268, %v2403
      %v2557 = vmul.f32 %v1270, %v2403
      %v2558 = vmul.f32 %v1272, %v2408
      %v2559 = vmul.f32 %v1274, %v2408
      %v2560 = vmul.f32 %v1278, %v2413
      %v2561 = vmul.f32 %v1280, %v2413
      %v2562 = vmul.f32 %v1282, %v2418
      %v2563 = vmul.f32 %v1284, %v2418
      %v2564 = vmul.f32 %v1288, %v2423
      %v2565 = vmul.f32 %v1290, %v2423
      %v2566 = vmul.f32 %v1292, %v2428
      %v2567 = vmul.f32 %v1294, %v2428
      %v2568 = vmul.f32 %v1298, %v2433
      %v2569 = vmul.f32 %v1300, %v2433
      %v2570 = vmul.f32 %v1302, %v2438
      %v2571 = vmul.f32 %v1304, %v2438
      %v2572 = vmul.f32 %v1308, %v2443
      %v2573 = vmul.f32 %v1310, %v2443
      %v2574 = vmul.f32 %v1312, %v2448
      %v2575 = vmul.f32 %v1314, %v2448
      %v2576 = vmul.f32 %v1318, %v2453
      %v2577 = vmul.f32 %v1320, %v2453
      %v2578 = vmul.f32 %v1322, %v2458
      %v2579 = vmul.f32 %v1324, %v2458
      %v2580 = vmul.f32 %v1328, %v2463
      %v2581 = vmul.f32 %v1330, %v2463
      %v2582 = vmul.f32 %v1332, %v2468
      %v2583 = vmul.f32 %v1334, %v2468
      %v2584 = vmul.f32 %v1338, %v2473
      %v2585 = vmul.f32 %v1340, %v2473
      %v2586 = vmul.f32 %v1342, %v2478
      %v2587 = vmul.f32 %v1344, %v2478
      %v2588 = vmul.f32 %v1348, %v2483
      %v2589 = vmul.f32 %v1350, %v2483
      %v2590 = vmul.f32 %v1352, %v2488
      %v2591 = vmul.f32 %v1354, %v2488
      %v2592 = vmul.f32 %v1358, %v2493
      %v2593 = vmul.f32 %v1360, %v2493
      %v2594 = vmul.f32 %v1362, %v2498
      %v2595 = vmul.f32 %v1364, %v2498
      %v2596 = vmul.f32 %v1368, %v2503
      %v2597 = vmul.f32 %v1370, %v2503
      %v2598 = vmul.f32 %v1372, %v2508
      %v2599 = vmul.f32 %v1374, %v2508
      %v2600 = vmul.f32 %v1378, %v2513
      %v2601 = vmul.f32 %v1380, %v2513
      %v2602 = vmul.f32 %v1382, %v2518
      %v2603 = vmul.f32 %v1384, %v2518
      %2605 = vset.pattern.permute.xlu0 0
      %2606 = vperm.xlu0 %2605, %v2268
      %v2607 = vpop.permute.xlu0 %2606
      %2610 = vset.pattern.permute.xlu0 0
      %2611 = vperm.xlu0 %2610, %v2269
      %v2612 = vpop.permute.xlu0 %2611
      %2615 = vset.pattern.permute.xlu0 0
      %2616 = vperm.xlu0 %2615, %v2270
      %v2617 = vpop.permute.xlu0 %2616
      %2620 = vset.pattern.permute.xlu0 0
      %2621 = vperm.xlu0 %2620, %v2271
      %v2622 = vpop.permute.xlu0 %2621
      %2625 = vset.pattern.permute.xlu0 0
      %2626 = vperm.xlu0 %2625, %v2272
      %v2627 = vpop.permute.xlu0 %2626
      %2630 = vset.pattern.permute.xlu0 0
      %2631 = vperm.xlu0 %2630, %v2273
      %v2632 = vpop.permute.xlu0 %2631
      %2635 = vset.pattern.permute.xlu0 0
      %2636 = vperm.xlu0 %2635, %v2274
      %v2637 = vpop.permute.xlu0 %2636
      %2640 = vset.pattern.permute.xlu0 0
      %2641 = vperm.xlu0 %2640, %v2275
      %v2642 = vpop.permute.xlu0 %2641
      %2645 = vset.pattern.permute.xlu0 0
      %2646 = vperm.xlu0 %2645, %v2276
      %v2647 = vpop.permute.xlu0 %2646
      %2650 = vset.pattern.permute.xlu0 0
      %2651 = vperm.xlu0 %2650, %v2277
      %v2652 = vpop.permute.xlu0 %2651
      %2655 = vset.pattern.permute.xlu0 0
      %2656 = vperm.xlu0 %2655, %v2278
      %v2657 = vpop.permute.xlu0 %2656
      %2660 = vset.pattern.permute.xlu0 0
      %2661 = vperm.xlu0 %2660, %v2279
      %v2662 = vpop.permute.xlu0 %2661
      %2665 = vset.pattern.permute.xlu0 0
      %2666 = vperm.xlu0 %2665, %v2280
      %v2667 = vpop.permute.xlu0 %2666
      %2670 = vset.pattern.permute.xlu0 0
      %2671 = vperm.xlu0 %2670, %v2281
      %v2672 = vpop.permute.xlu0 %2671
      %2675 = vset.pattern.permute.xlu0 0
      %2676 = vperm.xlu0 %2675, %v2282
      %v2677 = vpop.permute.xlu0 %2676
      %2680 = vset.pattern.permute.xlu0 0
      %2681 = vperm.xlu0 %2680, %v2283
      %v2682 = vpop.permute.xlu0 %2681
      %2685 = vset.pattern.permute.xlu0 0
      %2686 = vperm.xlu0 %2685, %v2284
      %v2687 = vpop.permute.xlu0 %2686
      %2690 = vset.pattern.permute.xlu0 0
      %2691 = vperm.xlu0 %2690, %v2285
      %v2692 = vpop.permute.xlu0 %2691
      %2695 = vset.pattern.permute.xlu0 0
      %2696 = vperm.xlu0 %2695, %v2286
      %v2697 = vpop.permute.xlu0 %2696
      %2700 = vset.pattern.permute.xlu0 0
      %2701 = vperm.xlu0 %2700, %v2287
      %v2702 = vpop.permute.xlu0 %2701
      %2705 = vset.pattern.permute.xlu0 0
      %2706 = vperm.xlu0 %2705, %v2288
      %v2707 = vpop.permute.xlu0 %2706
      %2710 = vset.pattern.permute.xlu0 0
      %2711 = vperm.xlu0 %2710, %v2289
      %v2712 = vpop.permute.xlu0 %2711
      %2715 = vset.pattern.permute.xlu0 0
      %2716 = vperm.xlu0 %2715, %v2290
      %v2717 = vpop.permute.xlu0 %2716
      %2720 = vset.pattern.permute.xlu0 0
      %2721 = vperm.xlu0 %2720, %v2291
      %v2722 = vpop.permute.xlu0 %2721
      %2725 = vset.pattern.permute.xlu0 0
      %2726 = vperm.xlu0 %2725, %v2292
      %v2727 = vpop.permute.xlu0 %2726
      %2730 = vset.pattern.permute.xlu0 0
      %2731 = vperm.xlu0 %2730, %v2293
      %v2732 = vpop.permute.xlu0 %2731
      %2735 = vset.pattern.permute.xlu0 0
      %2736 = vperm.xlu0 %2735, %v2294
      %v2737 = vpop.permute.xlu0 %2736
      %2740 = vset.pattern.permute.xlu0 0
      %2741 = vperm.xlu0 %2740, %v2295
      %v2742 = vpop.permute.xlu0 %2741
      %2745 = vset.pattern.permute.xlu0 0
      %2746 = vperm.xlu0 %2745, %v2296
      %v2747 = vpop.permute.xlu0 %2746
      %2750 = vset.pattern.permute.xlu0 0
      %2751 = vperm.xlu0 %2750, %v2297
      %v2752 = vpop.permute.xlu0 %2751
      %2755 = vset.pattern.permute.xlu0 0
      %2756 = vperm.xlu0 %2755, %v2298
      %v2757 = vpop.permute.xlu0 %2756
      %2760 = vset.pattern.permute.xlu0 0
      %2761 = vperm.xlu0 %2760, %v2299
      %v2762 = vpop.permute.xlu0 %2761
      %2765 = vset.pattern.permute.xlu0 0
      %2766 = vperm.xlu0 %2765, %v2300
      %v2767 = vpop.permute.xlu0 %2766
      %2770 = vset.pattern.permute.xlu0 0
      %2771 = vperm.xlu0 %2770, %v2301
      %v2772 = vpop.permute.xlu0 %2771
      %2775 = vset.pattern.permute.xlu0 0
      %2776 = vperm.xlu0 %2775, %v2302
      %v2777 = vpop.permute.xlu0 %2776
      %2780 = vset.pattern.permute.xlu0 0
      %2781 = vperm.xlu0 %2780, %v2303
      %v2782 = vpop.permute.xlu0 %2781
      %2785 = vset.pattern.permute.xlu0 0
      %2786 = vperm.xlu0 %2785, %v2304
      %v2787 = vpop.permute.xlu0 %2786
      %2790 = vset.pattern.permute.xlu0 0
      %2791 = vperm.xlu0 %2790, %v2305
      %v2792 = vpop.permute.xlu0 %2791
      %2795 = vset.pattern.permute.xlu0 0
      %2796 = vperm.xlu0 %2795, %v2306
      %v2797 = vpop.permute.xlu0 %2796
      %2800 = vset.pattern.permute.xlu0 0
      %2801 = vperm.xlu0 %2800, %v2307
      %v2802 = vpop.permute.xlu0 %2801
      %2805 = vset.pattern.permute.xlu0 0
      %2806 = vperm.xlu0 %2805, %v2308
      %v2807 = vpop.permute.xlu0 %2806
      %2810 = vset.pattern.permute.xlu0 0
      %2811 = vperm.xlu0 %2810, %v2309
      %v2812 = vpop.permute.xlu0 %2811
      %v2814 = vadd.f32 %v2520, %v2607
      %v2815 = vadd.f32 %v2521, %v2607
      %v2816 = vadd.f32 %v2522, %v2612
      %v2817 = vadd.f32 %v2523, %v2612
      %v2818 = vadd.f32 %v2524, %v2617
      %v2819 = vadd.f32 %v2525, %v2617
      %v2820 = vadd.f32 %v2526, %v2622
      %v2821 = vadd.f32 %v2527, %v2622
      %v2822 = vadd.f32 %v2528, %v2627
      %v2823 = vadd.f32 %v2529, %v2627
      %v2824 = vadd.f32 %v2530, %v2632
      %v2825 = vadd.f32 %v2531, %v2632
      %v2826 = vadd.f32 %v2532, %v2637
      %v2827 = vadd.f32 %v2533, %v2637
      %v2828 = vadd.f32 %v2534, %v2642
      %v2829 = vadd.f32 %v2535, %v2642
      %v2830 = vadd.f32 %v2536, %v2647
      %v2831 = vadd.f32 %v2537, %v2647
      %v2832 = vadd.f32 %v2538, %v2652
      %v2833 = vadd.f32 %v2539, %v2652
      %v2834 = vadd.f32 %v2540, %v2657
      %v2835 = vadd.f32 %v2541, %v2657
      %v2836 = vadd.f32 %v2542, %v2662
      %v2837 = vadd.f32 %v2543, %v2662
      %v2838 = vadd.f32 %v2544, %v2667
      %v2839 = vadd.f32 %v2545, %v2667
      %v2840 = vadd.f32 %v2546, %v2672
      %v2841 = vadd.f32 %v2547, %v2672
      %v2842 = vadd.f32 %v2548, %v2677
      %v2843 = vadd.f32 %v2549, %v2677
      %v2844 = vadd.f32 %v2550, %v2682
      %v2845 = vadd.f32 %v2551, %v2682
      %v2846 = vadd.f32 %v2552, %v2687
      %v2847 = vadd.f32 %v2553, %v2687
      %v2848 = vadd.f32 %v2554, %v2692
      %v2849 = vadd.f32 %v2555, %v2692
      %v2850 = vadd.f32 %v2556, %v2697
      %v2851 = vadd.f32 %v2557, %v2697
      %v2852 = vadd.f32 %v2558, %v2702
      %v2853 = vadd.f32 %v2559, %v2702
      %v2854 = vadd.f32 %v2560, %v2707
      %v2855 = vadd.f32 %v2561, %v2707
      %v2856 = vadd.f32 %v2562, %v2712
      %v2857 = vadd.f32 %v2563, %v2712
      %v2858 = vadd.f32 %v2564, %v2717
      %v2859 = vadd.f32 %v2565, %v2717
      %v2860 = vadd.f32 %v2566, %v2722
      %v2861 = vadd.f32 %v2567, %v2722
      %v2862 = vadd.f32 %v2568, %v2727
      %v2863 = vadd.f32 %v2569, %v2727
      %v2864 = vadd.f32 %v2570, %v2732
      %v2865 = vadd.f32 %v2571, %v2732
      %v2866 = vadd.f32 %v2572, %v2737
      %v2867 = vadd.f32 %v2573, %v2737
      %v2868 = vadd.f32 %v2574, %v2742
      %v2869 = vadd.f32 %v2575, %v2742
      %v2870 = vadd.f32 %v2576, %v2747
      %v2871 = vadd.f32 %v2577, %v2747
      %v2872 = vadd.f32 %v2578, %v2752
      %v2873 = vadd.f32 %v2579, %v2752
      %v2874 = vadd.f32 %v2580, %v2757
      %v2875 = vadd.f32 %v2581, %v2757
      %v2876 = vadd.f32 %v2582, %v2762
      %v2877 = vadd.f32 %v2583, %v2762
      %v2878 = vadd.f32 %v2584, %v2767
      %v2879 = vadd.f32 %v2585, %v2767
      %v2880 = vadd.f32 %v2586, %v2772
      %v2881 = vadd.f32 %v2587, %v2772
      %v2882 = vadd.f32 %v2588, %v2777
      %v2883 = vadd.f32 %v2589, %v2777
      %v2884 = vadd.f32 %v2590, %v2782
      %v2885 = vadd.f32 %v2591, %v2782
      %v2886 = vadd.f32 %v2592, %v2787
      %v2887 = vadd.f32 %v2593, %v2787
      %v2888 = vadd.f32 %v2594, %v2792
      %v2889 = vadd.f32 %v2595, %v2792
      %v2890 = vadd.f32 %v2596, %v2797
      %v2891 = vadd.f32 %v2597, %v2797
      %v2892 = vadd.f32 %v2598, %v2802
      %v2893 = vadd.f32 %v2599, %v2802
      %v2894 = vadd.f32 %v2600, %v2807
      %v2895 = vadd.f32 %v2601, %v2807
      %v2896 = vadd.f32 %v2602, %v2812
      %v2897 = vadd.f32 %v2603, %v2812
      %2898 = vst [vmem:[%s326] sm:$0xff] %v2814
      %2899 = vst.msk [vmem:[%s326 + $0x8] sm:$0xff] %vm357, %v2815
      %2900 = vst [vmem:[%s326 + $0x10] sm:$0xff] %v2816
      %2901 = vst.msk [vmem:[%s326 + $0x18] sm:$0xff] %vm357, %v2817
      %2902 = vst [vmem:[%s326 + $0x20] sm:$0xff] %v2818
      %2903 = vst.msk [vmem:[%s326 + $0x28] sm:$0xff] %vm357, %v2819
      %2904 = vst [vmem:[%s326 + $0x30] sm:$0xff] %v2820
      %2905 = vst.msk [vmem:[%s326 + $0x38] sm:$0xff] %vm357, %v2821
      %2906 = vst [vmem:[%s326 + $0x40] sm:$0xff] %v2822
      %2907 = vst.msk [vmem:[%s326 + $0x48] sm:$0xff] %vm357, %v2823
      %2908 = vst [vmem:[%s326 + $0x50] sm:$0xff] %v2824
      %2909 = vst.msk [vmem:[%s326 + $0x58] sm:$0xff] %vm357, %v2825
      %2910 = vst [vmem:[%s326 + $0x60] sm:$0xff] %v2826
      %2911 = vst.msk [vmem:[%s326 + $0x68] sm:$0xff] %vm357, %v2827
      %2912 = vst [vmem:[%s326 + $0x70] sm:$0xff] %v2828
      %2913 = vst.msk [vmem:[%s326 + $0x78] sm:$0xff] %vm357, %v2829
      %2914 = vst [vmem:[%s326 + $0x80] sm:$0xff] %v2830
      %2915 = vst.msk [vmem:[%s326 + $0x88] sm:$0xff] %vm357, %v2831
      %2916 = vst [vmem:[%s326 + $0x90] sm:$0xff] %v2832
      %2917 = vst.msk [vmem:[%s326 + $0x98] sm:$0xff] %vm357, %v2833
      %2918 = vst [vmem:[%s326 + $0xa0] sm:$0xff] %v2834
      %2919 = vst.msk [vmem:[%s326 + $0xa8] sm:$0xff] %vm357, %v2835
      %2920 = vst [vmem:[%s326 + $0xb0] sm:$0xff] %v2836
      %2921 = vst.msk [vmem:[%s326 + $0xb8] sm:$0xff] %vm357, %v2837
      %2922 = vst [vmem:[%s326 + $0xc0] sm:$0xff] %v2838
      %2923 = vst.msk [vmem:[%s326 + $0xc8] sm:$0xff] %vm357, %v2839
      %2924 = vst [vmem:[%s326 + $0xd0] sm:$0xff] %v2840
      %2925 = vst.msk [vmem:[%s326 + $0xd8] sm:$0xff] %vm357, %v2841
      %2926 = vst [vmem:[%s326 + $0xe0] sm:$0xff] %v2842
      %2927 = vst.msk [vmem:[%s326 + $0xe8] sm:$0xff] %vm357, %v2843
      %2928 = vst [vmem:[%s326 + $0xf0] sm:$0xff] %v2844
      %2929 = vst.msk [vmem:[%s326 + $0xf8] sm:$0xff] %vm357, %v2845
      %2930 = vst [vmem:[%s326 + $0x100] sm:$0xff] %v2846
      %2931 = vst.msk [vmem:[%s326 + $0x108] sm:$0xff] %vm357, %v2847
      %2932 = vst [vmem:[%s326 + $0x110] sm:$0xff] %v2848
      %2933 = vst.msk [vmem:[%s326 + $0x118] sm:$0xff] %vm357, %v2849
      %2934 = vst [vmem:[%s326 + $0x120] sm:$0xff] %v2850
      %2935 = vst.msk [vmem:[%s326 + $0x128] sm:$0xff] %vm357, %v2851
      %2936 = vst [vmem:[%s326 + $0x130] sm:$0xff] %v2852
      %2937 = vst.msk [vmem:[%s326 + $0x138] sm:$0xff] %vm357, %v2853
      %2938 = vst [vmem:[%s326 + $0x140] sm:$0xff] %v2854
      %2939 = vst.msk [vmem:[%s326 + $0x148] sm:$0xff] %vm357, %v2855
      %2940 = vst [vmem:[%s326 + $0x150] sm:$0xff] %v2856
      %2941 = vst.msk [vmem:[%s326 + $0x158] sm:$0xff] %vm357, %v2857
      %2942 = vst [vmem:[%s326 + $0x160] sm:$0xff] %v2858
      %2943 = vst.msk [vmem:[%s326 + $0x168] sm:$0xff] %vm357, %v2859
      %2944 = vst [vmem:[%s326 + $0x170] sm:$0xff] %v2860
      %2945 = vst.msk [vmem:[%s326 + $0x178] sm:$0xff] %vm357, %v2861
      %2946 = vst [vmem:[%s326 + $0x180] sm:$0xff] %v2862
      %2947 = vst.msk [vmem:[%s326 + $0x188] sm:$0xff] %vm357, %v2863
      %2948 = vst [vmem:[%s326 + $0x190] sm:$0xff] %v2864
      %2949 = vst.msk [vmem:[%s326 + $0x198] sm:$0xff] %vm357, %v2865
      %2950 = vst [vmem:[%s326 + $0x1a0] sm:$0xff] %v2866
      %2951 = vst.msk [vmem:[%s326 + $0x1a8] sm:$0xff] %vm357, %v2867
      %2952 = vst [vmem:[%s326 + $0x1b0] sm:$0xff] %v2868
      %2953 = vst.msk [vmem:[%s326 + $0x1b8] sm:$0xff] %vm357, %v2869
      %2954 = vst [vmem:[%s326 + $0x1c0] sm:$0xff] %v2870
      %2955 = vst.msk [vmem:[%s326 + $0x1c8] sm:$0xff] %vm357, %v2871
      %2956 = vst [vmem:[%s326 + $0x1d0] sm:$0xff] %v2872
      %2957 = vst.msk [vmem:[%s326 + $0x1d8] sm:$0xff] %vm357, %v2873
      %2958 = vst [vmem:[%s326 + $0x1e0] sm:$0xff] %v2874
      %2959 = vst.msk [vmem:[%s326 + $0x1e8] sm:$0xff] %vm357, %v2875
      %2960 = vst [vmem:[%s326 + $0x1f0] sm:$0xff] %v2876
      %2961 = vst.msk [vmem:[%s326 + $0x1f8] sm:$0xff] %vm357, %v2877
      %2962 = vst [vmem:[%s326 + $0x200] sm:$0xff] %v2878
      %2963 = vst.msk [vmem:[%s326 + $0x208] sm:$0xff] %vm357, %v2879
      %2964 = vst [vmem:[%s326 + $0x210] sm:$0xff] %v2880
      %2965 = vst.msk [vmem:[%s326 + $0x218] sm:$0xff] %vm357, %v2881
      %2966 = vst [vmem:[%s326 + $0x220] sm:$0xff] %v2882
      %2967 = vst.msk [vmem:[%s326 + $0x228] sm:$0xff] %vm357, %v2883
      %2968 = vst [vmem:[%s326 + $0x230] sm:$0xff] %v2884
      %2969 = vst.msk [vmem:[%s326 + $0x238] sm:$0xff] %vm357, %v2885
      %2970 = vst [vmem:[%s326 + $0x240] sm:$0xff] %v2886
      %2971 = vst.msk [vmem:[%s326 + $0x248] sm:$0xff] %vm357, %v2887
      %2972 = vst [vmem:[%s326 + $0x250] sm:$0xff] %v2888
      %2973 = vst.msk [vmem:[%s326 + $0x258] sm:$0xff] %vm357, %v2889
      %2974 = vst [vmem:[%s326 + $0x260] sm:$0xff] %v2890
      %2975 = vst.msk [vmem:[%s326 + $0x268] sm:$0xff] %vm357, %v2891
      %2976 = vst [vmem:[%s326 + $0x270] sm:$0xff] %v2892
      %2977 = vst.msk [vmem:[%s326 + $0x278] sm:$0xff] %vm357, %v2893
      %2978 = vst [vmem:[%s326 + $0x280] sm:$0xff] %v2894
      %2979 = vst.msk [vmem:[%s326 + $0x288] sm:$0xff] %vm357, %v2895
      %2980 = vst [vmem:[%s326 + $0x290] sm:$0xff] %v2896
      %2981 = vst.msk [vmem:[%s326 + $0x298] sm:$0xff] %vm357, %v2897
      %s2982 = smul.u32 42, %s18
      %p2983 = scmp.lt.s32.totalorder %s2982, 83
      %s2984 = scalar_select %p2983, %s2982, 83
      %s2985 = smul.addr %s2984, 2
      %s2986 = smul.addr %s2985, 8
      %s2987 = scalar_lea.vmem %s7, %s2986
      // Predicated region
      $region49: #{fused_bn_add_conv_bn.1} parent=47 // pred_check
        %p2988 = pneg %p198
      $region50: #{fused_bn_add_conv_bn.1} parent=47 // pred_check_branch
        %2990 = sbr.rel (%p2988) target = $region52
      $region51: #{fused_bn_add_conv_bn.1} parent=47 // pred_region
        %s2991 = smul.u32 42, %s18
      $region52: #{fused_bn_add_conv_bn.1} parent=47 // pred_fallthru
        _
    $region48: #{fused_bn_add_conv_bn.1} parent=5 // pred_fallthru
      _
    %p2992 = scmp.le.s32.totalorder 2, %s13
    // Predicated region
    $region53: #{fused_bn_add_conv_bn.1} parent=5 // pred_check
      %p2993 = pneg %p2992
    $region54: #{fused_bn_add_conv_bn.1} parent=5 // pred_check_branch
      %2995 = sbr.rel (%p2993) target = $region56
    $region55: #{fused_bn_add_conv_bn.1} parent=5 // pred_region
      %s2996 = ssub.s32 %s13, 2
      // Predicated region
      $region57: #{fused_bn_add_conv_bn.1} parent=55 // pred_check
        %p2997 = pneg %p204
      $region58: #{fused_bn_add_conv_bn.1} parent=55 // pred_check_branch
        %2999 = sbr.rel (%p2997) target = $region60
      $region59: #{fused_bn_add_conv_bn.1} parent=55 // pred_region
        %s3000 = smul.u32 42, %s19
        %p3001 = scmp.lt.s32.totalorder %s3000, 83
        %s3002 = scalar_select %p3001, %s3000, 83
        %s3003 = smul.addr %s3002, 2
        %s3004 = smul.addr %s3003, 8
        %s3005 = scalar_lea.vmem %s7, %s3004
      $region60: #{fused_bn_add_conv_bn.1} parent=55 // pred_fallthru
        _
    $region56: #{fused_bn_add_conv_bn.1} parent=5 // pred_fallthru
      _
  $region6: #{fused_bn_add_conv_bn.1} parent=0 // loop_footer
    %s17 = sadd.s32 1, %s13
  $region7: #{fused_bn_add_conv_bn.1} parent=0 // loop_footer_branch
    %12 = sbr.rel target = $region3
  $region8: #{fused_bn_add_conv_bn.1} parent=0 // loop_exit
    _

</llo_original>
